<compile_context>
chip_gen: v5e
topology: v5e:2x2
jax: 0.10.0
libtpu: 0.0.40
codegen_flags: <defaults>
</compile_context>

<pallas_src>
import jax
import jax.numpy as jnp
from jax.experimental import pallas as pl
from jax.experimental.pallas import tpu as pltpu


# --------------------------------------------------------------------------
# Fused kernel: all GRU layers + FC head in one pallas_call.
# --------------------------------------------------------------------------
def _make_fused_gru_kernel(num_layers, T, B, H):
    """Returns a kernel with signature
       kernel(x_ref, (w_i, w_h, b_i, b_h) * num_layers, fc_w, fc_b, out_ref)
    x_ref:  [T*B, D_in]   (time-major, batch flattened into rows)
    out_ref:[B, O]
    """

    def kernel(*refs):
        x_ref = refs[0]
        layer_refs = refs[1:1 + 4 * num_layers]
        fc_w_ref = refs[1 + 4 * num_layers]
        fc_b_ref = refs[2 + 4 * num_layers]
        out_ref = refs[3 + 4 * num_layers]

        seq = x_ref[...].astype(jnp.float32)            # [T*B, D_in]
        h = jnp.zeros((B, H), jnp.float32)

        for l in range(num_layers):
            w_i = layer_refs[4 * l + 0][...]            # [D_in_l, 3H]
            w_h = layer_refs[4 * l + 1][...]            # [H, 3H]
            b_i = layer_refs[4 * l + 2][...]            # [1, 3H]
            b_h = layer_refs[4 * l + 3][...]            # [1, 3H]

            # Hoisted input projection for ALL timesteps: one MXU-friendly
            # matmul instead of T tiny ones inside the recurrence.
            gi_all = (jnp.dot(seq, w_i, preferred_element_type=jnp.float32)
                      + b_i)                            # [T*B, 3H]

            h = jnp.zeros((B, H), jnp.float32)
            hs = []
            # Static unroll over time: serial path per step is a single
            # [B,H]x[H,3H] matmul + gate math (EUP/VPU).
            for t in range(T):
                gi = gi_all[t * B:(t + 1) * B, :]       # [B, 3H] (static slice)
                gh = (jnp.dot(h, w_h, preferred_element_type=jnp.float32)
                      + b_h)                            # [B, 3H]
                r = jax.nn.sigmoid(gi[:, 0 * H:1 * H] + gh[:, 0 * H:1 * H])
                z = jax.nn.sigmoid(gi[:, 1 * H:2 * H] + gh[:, 1 * H:2 * H])
                n = jnp.tanh(gi[:, 2 * H:3 * H] + r * gh[:, 2 * H:3 * H])
                h = (1.0 - z) * n + z * h
                if l < num_layers - 1:
                    hs.append(h)

            if l < num_layers - 1:
                # Hidden sequence of this layer is the (flattened) input of
                # the next layer; stays entirely in VMEM / vregs.
                seq = jnp.concatenate(hs, axis=0)       # [T*B, H]

        # Fused FC head on the last timestep's hidden state.
        out = (jnp.dot(h, fc_w_ref[...], preferred_element_type=jnp.float32)
               + fc_b_ref[...])                         # [B, O]
        out_ref[...] = out.astype(out_ref.dtype)

    return kernel


def _round_up(n, m):
    return -(-n // m) * m


# --------------------------------------------------------------------------
# Full module forward (matches the PyTorch GRU.forward semantics).
# --------------------------------------------------------------------------
def gru_model_forward(x, params):
    N = x.shape[0]
    d_feat = params["d_feat"]
    H = params["hidden_size"]
    O = params["output_dim"]
    num_layers = len(params["layers"])

    x = x.reshape(N, d_feat, -1)                 # [N, d_feat, T]
    T = x.shape[-1]
    x = jnp.transpose(x, (0, 2, 1))              # [N, T, d_feat]  (batch_first)
    x = jnp.transpose(x, (1, 0, 2))              # [T, N, d_feat]  (time-major)

    # Pad batch to a multiple of 8 for sublane alignment (padded rows are
    # independent of the real rows and sliced off at the end).
    B = max(8, _round_up(N, 8))
    if B != N:
        x = jnp.pad(x, ((0, 0), (0, B - N), (0, 0)))
    x_flat = x.reshape(T * B, d_feat).astype(jnp.float32)   # [T*B, d_feat]

    args = [x_flat]
    for lp in params["layers"]:
        args += [lp["w_i"], lp["w_h"], lp["b_i"], lp["b_h"]]
    args += [params["fc_w"], params["fc_b"]]

    kernel = _make_fused_gru_kernel(num_layers, T, B, H)

    out = pl.pallas_call(
        kernel,
        out_shape=jax.ShapeDtypeStruct((B, O), jnp.float32),
        in_specs=[pl.BlockSpec(memory_space=pltpu.MemorySpace.VMEM)] * len(args),
        out_specs=pl.BlockSpec(memory_space=pltpu.MemorySpace.VMEM),
    )(*args)

    out = out[:N]                                # drop batch padding
    out = jnp.squeeze(out)                       # .squeeze()
    if O > 1:
        out = jax.nn.softmax(out, axis=1)
    return out


# --------------------------------------------------------------------------
# Deterministic parameter init (PyTorch-style U(-1/sqrt(H), 1/sqrt(H))),
# weights stored fused and pre-transposed: W_i [in, 3H], W_h [H, 3H].
# Gate column order is (r | z | n), matching PyTorch's nn.GRU.
# --------------------------------------------------------------------------
def init_params(key, d_feat=6, hidden_size=32, num_layers=2, output_dim=1):
    bound = 1.0 / float(hidden_size) ** 0.5

    def uni(k, shape):
        return jax.random.uniform(k, shape, jnp.float32, -bound, bound)

    params = {"d_feat": d_feat, "hidden_size": hidden_size,
              "output_dim": output_dim, "layers": []}
    for l in range(num_layers):
        in_dim = d_feat if l == 0 else hidden_size
        key, k0, k1, k2, k3 = jax.random.split(key, 5)
        params["layers"].append({
            "w_i": uni(k0, (in_dim, 3 * hidden_size)),
            "w_h": uni(k1, (hidden_size, 3 * hidden_size)),
            "b_i": uni(k2, (1, 3 * hidden_size)),
            "b_h": uni(k3, (1, 3 * hidden_size)),
        })
    key, k_w, k_b = jax.random.split(key, 3)
    params["fc_w"] = uni(k_w, (hidden_size, output_dim))
    params["fc_b"] = uni(k_b, (1, output_dim))
    return params


# --------------------------------------------------------------------------
# Pure-JAX reference (lax.scan) for verification.
# --------------------------------------------------------------------------
def _gru_layer_ref(x_tbd, lp):
    H = lp["w_h"].shape[0]

    def step(h, x_t):
        gi = x_t @ lp["w_i"] + lp["b_i"]
        gh = h @ lp["w_h"] + lp["b_h"]
        r = jax.nn.sigmoid(gi[:, :H] + gh[:, :H])
        z = jax.nn.sigmoid(gi[:, H:2 * H] + gh[:, H:2 * H])
        n = jnp.tanh(gi[:, 2 * H:] + r * gh[:, 2 * H:])
        h_new = (1.0 - z) * n + z * h
        return h_new, h_new

    h0 = jnp.zeros((x_tbd.shape[1], H), jnp.float32)
    _, hs = jax.lax.scan(step, h0, x_tbd)
    return hs


def gru_model_ref(x, params):
    N = x.shape[0]
    x = x.reshape(N, params["d_feat"], -1)
    x = jnp.transpose(x, (0, 2, 1))
    x = jnp.transpose(x, (1, 0, 2)).astype(jnp.float32)
    h = x
    for lp in params["layers"]:
        h = _gru_layer_ref(h, lp)
    out = h[-1] @ params["fc_w"] + params["fc_b"]
    out = jnp.squeeze(out)
    if params["output_dim"] > 1:
        out = jax.nn.softmax(out, axis=1)
    return out


if __name__ == "__main__":
    key = jax.random.PRNGKey(0)
    d_feat, T, N = 6, 8, 2
    hidden_size, num_layers, output_dim = 32, 2, 1

    k_p, k_x = jax.random.split(key)
    params = init_params(k_p, d_feat=d_feat, hidden_size=hidden_size,
                         num_layers=num_layers, output_dim=output_dim)
    x = jax.random.normal(k_x, (N, d_feat * T), jnp.float32)   # [2, 48]

    out = gru_model_forward(x, params)
    out = jax.block_until_ready(out)

    ref = jax.block_until_ready(gru_model_ref(x, params))
    assert out.shape == ref.shape == (N,), (out.shape, ref.shape)
    assert jnp.allclose(out, ref, atol=1e-4, rtol=1e-4), (out, ref)

    print("KERNEL_OK")
</pallas_src>

<mosaic_0001>
module attributes {stable_mosaic.version = 11 : i64} {
  func.func @kernel(%arg0: memref<64x6xf32, #tpu.memory_space<vmem>>, %arg1: memref<6x96xf32, #tpu.memory_space<vmem>>, %arg2: memref<32x96xf32, #tpu.memory_space<vmem>>, %arg3: memref<1x96xf32, #tpu.memory_space<vmem>>, %arg4: memref<1x96xf32, #tpu.memory_space<vmem>>, %arg5: memref<32x96xf32, #tpu.memory_space<vmem>>, %arg6: memref<32x96xf32, #tpu.memory_space<vmem>>, %arg7: memref<1x96xf32, #tpu.memory_space<vmem>>, %arg8: memref<1x96xf32, #tpu.memory_space<vmem>>, %arg9: memref<32x1xf32, #tpu.memory_space<vmem>>, %arg10: memref<1x1xf32, #tpu.memory_space<vmem>>, %arg11: memref<8x1xf32, #tpu.memory_space<vmem>>) attributes {dimension_semantics = [], scalar_prefetch = 0 : i64, scratch_operands = 0 : i64, tpu.core_type = #tpu.core_type<tc>} {
    %c0 = arith.constant 0 : index
    %c0_0 = arith.constant 0 : index
    %0 = vector.load %arg0[%c0, %c0_0] : memref<64x6xf32, #tpu.memory_space<vmem>>, vector<64x6xf32>
    %c0_1 = arith.constant 0 : index
    %c0_2 = arith.constant 0 : index
    %1 = vector.load %arg1[%c0_1, %c0_2] : memref<6x96xf32, #tpu.memory_space<vmem>>, vector<6x96xf32>
    %c0_3 = arith.constant 0 : index
    %c0_4 = arith.constant 0 : index
    %2 = vector.load %arg2[%c0_3, %c0_4] : memref<32x96xf32, #tpu.memory_space<vmem>>, vector<32x96xf32>
    %c0_5 = arith.constant 0 : index
    %c0_6 = arith.constant 0 : index
    %3 = vector.load %arg3[%c0_5, %c0_6] : memref<1x96xf32, #tpu.memory_space<vmem>>, vector<1x96xf32>
    %c0_7 = arith.constant 0 : index
    %c0_8 = arith.constant 0 : index
    %4 = vector.load %arg4[%c0_7, %c0_8] : memref<1x96xf32, #tpu.memory_space<vmem>>, vector<1x96xf32>
    %cst = arith.constant dense<0.000000e+00> : vector<64x96xf32>
    %5 = tpu.matmul %0, %1, %cst {dimension_numbers = #tpu.dot_dimension_numbers<[1], [0], [0], [1], [0, 0, 1, 1], [], []>} : vector<64x6xf32>, vector<6x96xf32>, vector<64x96xf32> -> vector<64x96xf32>
    %6 = vector.broadcast %3 : vector<1x96xf32> to vector<64x96xf32>
    %7 = arith.addf %5, %6 : vector<64x96xf32>
    %cst_9 = arith.constant 0.000000e+00 : f32
    %8 = vector.broadcast %cst_9 : f32 to vector<8x32xf32>
    %9 = vector.extract_strided_slice %7 {offsets = [0, 0], sizes = [8, 96], strides = [1, 1]} : vector<64x96xf32> to vector<8x96xf32>
    %cst_10 = arith.constant dense<0.000000e+00> : vector<8x96xf32>
    %10 = tpu.matmul %8, %2, %cst_10 {dimension_numbers = #tpu.dot_dimension_numbers<[1], [0], [0], [1], [0, 0, 1, 1], [], []>} : vector<8x32xf32>, vector<32x96xf32>, vector<8x96xf32> -> vector<8x96xf32>
    %11 = vector.broadcast %4 : vector<1x96xf32> to vector<8x96xf32>
    %12 = arith.addf %10, %11 : vector<8x96xf32>
    %13 = vector.extract_strided_slice %9 {offsets = [0, 0], sizes = [8, 32], strides = [1, 1]} : vector<8x96xf32> to vector<8x32xf32>
    %14 = vector.extract_strided_slice %12 {offsets = [0, 0], sizes = [8, 32], strides = [1, 1]} : vector<8x96xf32> to vector<8x32xf32>
    %15 = arith.addf %13, %14 : vector<8x32xf32>
    %16 = arith.negf %15 : vector<8x32xf32>
    %17 = math.exp %16 : vector<8x32xf32>
    %cst_11 = arith.constant 1.000000e+00 : f32
    %18 = vector.broadcast %cst_11 : f32 to vector<8x32xf32>
    %19 = arith.addf %18, %17 : vector<8x32xf32>
    %20 = arith.divf %18, %19 : vector<8x32xf32>
    %21 = vector.extract_strided_slice %9 {offsets = [0, 32], sizes = [8, 32], strides = [1, 1]} : vector<8x96xf32> to vector<8x32xf32>
    %22 = vector.extract_strided_slice %12 {offsets = [0, 32], sizes = [8, 32], strides = [1, 1]} : vector<8x96xf32> to vector<8x32xf32>
    %23 = arith.addf %21, %22 : vector<8x32xf32>
    %24 = arith.negf %23 : vector<8x32xf32>
    %25 = math.exp %24 : vector<8x32xf32>
    %cst_12 = arith.constant 1.000000e+00 : f32
    %26 = vector.broadcast %cst_12 : f32 to vector<8x32xf32>
    %27 = arith.addf %26, %25 : vector<8x32xf32>
    %28 = arith.divf %26, %27 : vector<8x32xf32>
    %29 = vector.extract_strided_slice %9 {offsets = [0, 64], sizes = [8, 32], strides = [1, 1]} : vector<8x96xf32> to vector<8x32xf32>
    %30 = vector.extract_strided_slice %12 {offsets = [0, 64], sizes = [8, 32], strides = [1, 1]} : vector<8x96xf32> to vector<8x32xf32>
    %31 = arith.mulf %20, %30 : vector<8x32xf32>
    %32 = arith.addf %29, %31 : vector<8x32xf32>
    %33 = math.tanh %32 : vector<8x32xf32>
    %cst_13 = arith.constant 1.000000e+00 : f32
    %34 = vector.broadcast %cst_13 : f32 to vector<8x32xf32>
    %35 = arith.subf %34, %28 : vector<8x32xf32>
    %36 = arith.mulf %35, %33 : vector<8x32xf32>
    %37 = arith.mulf %28, %8 : vector<8x32xf32>
    %38 = arith.addf %36, %37 : vector<8x32xf32>
    %39 = vector.extract_strided_slice %7 {offsets = [8, 0], sizes = [8, 96], strides = [1, 1]} : vector<64x96xf32> to vector<8x96xf32>
    %cst_14 = arith.constant dense<0.000000e+00> : vector<8x96xf32>
    %40 = tpu.matmul %38, %2, %cst_14 {dimension_numbers = #tpu.dot_dimension_numbers<[1], [0], [0], [1], [0, 0, 1, 1], [], []>} : vector<8x32xf32>, vector<32x96xf32>, vector<8x96xf32> -> vector<8x96xf32>
    %41 = vector.broadcast %4 : vector<1x96xf32> to vector<8x96xf32>
    %42 = arith.addf %40, %41 : vector<8x96xf32>
    %43 = vector.extract_strided_slice %39 {offsets = [0, 0], sizes = [8, 32], strides = [1, 1]} : vector<8x96xf32> to vector<8x32xf32>
    %44 = vector.extract_strided_slice %42 {offsets = [0, 0], sizes = [8, 32], strides = [1, 1]} : vector<8x96xf32> to vector<8x32xf32>
    %45 = arith.addf %43, %44 : vector<8x32xf32>
    %46 = arith.negf %45 : vector<8x32xf32>
    %47 = math.exp %46 : vector<8x32xf32>
    %cst_15 = arith.constant 1.000000e+00 : f32
    %48 = vector.broadcast %cst_15 : f32 to vector<8x32xf32>
    %49 = arith.addf %48, %47 : vector<8x32xf32>
    %50 = arith.divf %48, %49 : vector<8x32xf32>
    %51 = vector.extract_strided_slice %39 {offsets = [0, 32], sizes = [8, 32], strides = [1, 1]} : vector<8x96xf32> to vector<8x32xf32>
    %52 = vector.extract_strided_slice %42 {offsets = [0, 32], sizes = [8, 32], strides = [1, 1]} : vector<8x96xf32> to vector<8x32xf32>
    %53 = arith.addf %51, %52 : vector<8x32xf32>
    %54 = arith.negf %53 : vector<8x32xf32>
    %55 = math.exp %54 : vector<8x32xf32>
    %cst_16 = arith.constant 1.000000e+00 : f32
    %56 = vector.broadcast %cst_16 : f32 to vector<8x32xf32>
    %57 = arith.addf %56, %55 : vector<8x32xf32>
    %58 = arith.divf %56, %57 : vector<8x32xf32>
    %59 = vector.extract_strided_slice %39 {offsets = [0, 64], sizes = [8, 32], strides = [1, 1]} : vector<8x96xf32> to vector<8x32xf32>
    %60 = vector.extract_strided_slice %42 {offsets = [0, 64], sizes = [8, 32], strides = [1, 1]} : vector<8x96xf32> to vector<8x32xf32>
    %61 = arith.mulf %50, %60 : vector<8x32xf32>
    %62 = arith.addf %59, %61 : vector<8x32xf32>
    %63 = math.tanh %62 : vector<8x32xf32>
    %cst_17 = arith.constant 1.000000e+00 : f32
    %64 = vector.broadcast %cst_17 : f32 to vector<8x32xf32>
    %65 = arith.subf %64, %58 : vector<8x32xf32>
    %66 = arith.mulf %65, %63 : vector<8x32xf32>
    %67 = arith.mulf %58, %38 : vector<8x32xf32>
    %68 = arith.addf %66, %67 : vector<8x32xf32>
    %69 = vector.extract_strided_slice %7 {offsets = [16, 0], sizes = [8, 96], strides = [1, 1]} : vector<64x96xf32> to vector<8x96xf32>
    %cst_18 = arith.constant dense<0.000000e+00> : vector<8x96xf32>
    %70 = tpu.matmul %68, %2, %cst_18 {dimension_numbers = #tpu.dot_dimension_numbers<[1], [0], [0], [1], [0, 0, 1, 1], [], []>} : vector<8x32xf32>, vector<32x96xf32>, vector<8x96xf32> -> vector<8x96xf32>
    %71 = vector.broadcast %4 : vector<1x96xf32> to vector<8x96xf32>
    %72 = arith.addf %70, %71 : vector<8x96xf32>
    %73 = vector.extract_strided_slice %69 {offsets = [0, 0], sizes = [8, 32], strides = [1, 1]} : vector<8x96xf32> to vector<8x32xf32>
    %74 = vector.extract_strided_slice %72 {offsets = [0, 0], sizes = [8, 32], strides = [1, 1]} : vector<8x96xf32> to vector<8x32xf32>
    %75 = arith.addf %73, %74 : vector<8x32xf32>
    %76 = arith.negf %75 : vector<8x32xf32>
    %77 = math.exp %76 : vector<8x32xf32>
    %cst_19 = arith.constant 1.000000e+00 : f32
    %78 = vector.broadcast %cst_19 : f32 to vector<8x32xf32>
    %79 = arith.addf %78, %77 : vector<8x32xf32>
    %80 = arith.divf %78, %79 : vector<8x32xf32>
    %81 = vector.extract_strided_slice %69 {offsets = [0, 32], sizes = [8, 32], strides = [1, 1]} : vector<8x96xf32> to vector<8x32xf32>
    %82 = vector.extract_strided_slice %72 {offsets = [0, 32], sizes = [8, 32], strides = [1, 1]} : vector<8x96xf32> to vector<8x32xf32>
    %83 = arith.addf %81, %82 : vector<8x32xf32>
    %84 = arith.negf %83 : vector<8x32xf32>
    %85 = math.exp %84 : vector<8x32xf32>
    %cst_20 = arith.constant 1.000000e+00 : f32
    %86 = vector.broadcast %cst_20 : f32 to vector<8x32xf32>
    %87 = arith.addf %86, %85 : vector<8x32xf32>
    %88 = arith.divf %86, %87 : vector<8x32xf32>
    %89 = vector.extract_strided_slice %69 {offsets = [0, 64], sizes = [8, 32], strides = [1, 1]} : vector<8x96xf32> to vector<8x32xf32>
    %90 = vector.extract_strided_slice %72 {offsets = [0, 64], sizes = [8, 32], strides = [1, 1]} : vector<8x96xf32> to vector<8x32xf32>
    %91 = arith.mulf %80, %90 : vector<8x32xf32>
    %92 = arith.addf %89, %91 : vector<8x32xf32>
    %93 = math.tanh %92 : vector<8x32xf32>
    %cst_21 = arith.constant 1.000000e+00 : f32
    %94 = vector.broadcast %cst_21 : f32 to vector<8x32xf32>
    %95 = arith.subf %94, %88 : vector<8x32xf32>
    %96 = arith.mulf %95, %93 : vector<8x32xf32>
    %97 = arith.mulf %88, %68 : vector<8x32xf32>
    %98 = arith.addf %96, %97 : vector<8x32xf32>
    %99 = vector.extract_strided_slice %7 {offsets = [24, 0], sizes = [8, 96], strides = [1, 1]} : vector<64x96xf32> to vector<8x96xf32>
    %cst_22 = arith.constant dense<0.000000e+00> : vector<8x96xf32>
    %100 = tpu.matmul %98, %2, %cst_22 {dimension_numbers = #tpu.dot_dimension_numbers<[1], [0], [0], [1], [0, 0, 1, 1], [], []>} : vector<8x32xf32>, vector<32x96xf32>, vector<8x96xf32> -> vector<8x96xf32>
    %101 = vector.broadcast %4 : vector<1x96xf32> to vector<8x96xf32>
    %102 = arith.addf %100, %101 : vector<8x96xf32>
    %103 = vector.extract_strided_slice %99 {offsets = [0, 0], sizes = [8, 32], strides = [1, 1]} : vector<8x96xf32> to vector<8x32xf32>
    %104 = vector.extract_strided_slice %102 {offsets = [0, 0], sizes = [8, 32], strides = [1, 1]} : vector<8x96xf32> to vector<8x32xf32>
    %105 = arith.addf %103, %104 : vector<8x32xf32>
    %106 = arith.negf %105 : vector<8x32xf32>
    %107 = math.exp %106 : vector<8x32xf32>
    %cst_23 = arith.constant 1.000000e+00 : f32
    %108 = vector.broadcast %cst_23 : f32 to vector<8x32xf32>
    %109 = arith.addf %108, %107 : vector<8x32xf32>
    %110 = arith.divf %108, %109 : vector<8x32xf32>
    %111 = vector.extract_strided_slice %99 {offsets = [0, 32], sizes = [8, 32], strides = [1, 1]} : vector<8x96xf32> to vector<8x32xf32>
    %112 = vector.extract_strided_slice %102 {offsets = [0, 32], sizes = [8, 32], strides = [1, 1]} : vector<8x96xf32> to vector<8x32xf32>
    %113 = arith.addf %111, %112 : vector<8x32xf32>
    %114 = arith.negf %113 : vector<8x32xf32>
    %115 = math.exp %114 : vector<8x32xf32>
    %cst_24 = arith.constant 1.000000e+00 : f32
    %116 = vector.broadcast %cst_24 : f32 to vector<8x32xf32>
    %117 = arith.addf %116, %115 : vector<8x32xf32>
    %118 = arith.divf %116, %117 : vector<8x32xf32>
    %119 = vector.extract_strided_slice %99 {offsets = [0, 64], sizes = [8, 32], strides = [1, 1]} : vector<8x96xf32> to vector<8x32xf32>
    %120 = vector.extract_strided_slice %102 {offsets = [0, 64], sizes = [8, 32], strides = [1, 1]} : vector<8x96xf32> to vector<8x32xf32>
    %121 = arith.mulf %110, %120 : vector<8x32xf32>
    %122 = arith.addf %119, %121 : vector<8x32xf32>
    %123 = math.tanh %122 : vector<8x32xf32>
    %cst_25 = arith.constant 1.000000e+00 : f32
    %124 = vector.broadcast %cst_25 : f32 to vector<8x32xf32>
    %125 = arith.subf %124, %118 : vector<8x32xf32>
    %126 = arith.mulf %125, %123 : vector<8x32xf32>
    %127 = arith.mulf %118, %98 : vector<8x32xf32>
    %128 = arith.addf %126, %127 : vector<8x32xf32>
    %129 = vector.extract_strided_slice %7 {offsets = [32, 0], sizes = [8, 96], strides = [1, 1]} : vector<64x96xf32> to vector<8x96xf32>
    %cst_26 = arith.constant dense<0.000000e+00> : vector<8x96xf32>
    %130 = tpu.matmul %128, %2, %cst_26 {dimension_numbers = #tpu.dot_dimension_numbers<[1], [0], [0], [1], [0, 0, 1, 1], [], []>} : vector<8x32xf32>, vector<32x96xf32>, vector<8x96xf32> -> vector<8x96xf32>
    %131 = vector.broadcast %4 : vector<1x96xf32> to vector<8x96xf32>
    %132 = arith.addf %130, %131 : vector<8x96xf32>
    %133 = vector.extract_strided_slice %129 {offsets = [0, 0], sizes = [8, 32], strides = [1, 1]} : vector<8x96xf32> to vector<8x32xf32>
    %134 = vector.extract_strided_slice %132 {offsets = [0, 0], sizes = [8, 32], strides = [1, 1]} : vector<8x96xf32> to vector<8x32xf32>
    %135 = arith.addf %133, %134 : vector<8x32xf32>
    %136 = arith.negf %135 : vector<8x32xf32>
    %137 = math.exp %136 : vector<8x32xf32>
    %cst_27 = arith.constant 1.000000e+00 : f32
    %138 = vector.broadcast %cst_27 : f32 to vector<8x32xf32>
    %139 = arith.addf %138, %137 : vector<8x32xf32>
    %140 = arith.divf %138, %139 : vector<8x32xf32>
    %141 = vector.extract_strided_slice %129 {offsets = [0, 32], sizes = [8, 32], strides = [1, 1]} : vector<8x96xf32> to vector<8x32xf32>
    %142 = vector.extract_strided_slice %132 {offsets = [0, 32], sizes = [8, 32], strides = [1, 1]} : vector<8x96xf32> to vector<8x32xf32>
    %143 = arith.addf %141, %142 : vector<8x32xf32>
    %144 = arith.negf %143 : vector<8x32xf32>
    %145 = math.exp %144 : vector<8x32xf32>
    %cst_28 = arith.constant 1.000000e+00 : f32
    %146 = vector.broadcast %cst_28 : f32 to vector<8x32xf32>
    %147 = arith.addf %146, %145 : vector<8x32xf32>
    %148 = arith.divf %146, %147 : vector<8x32xf32>
    %149 = vector.extract_strided_slice %129 {offsets = [0, 64], sizes = [8, 32], strides = [1, 1]} : vector<8x96xf32> to vector<8x32xf32>
    %150 = vector.extract_strided_slice %132 {offsets = [0, 64], sizes = [8, 32], strides = [1, 1]} : vector<8x96xf32> to vector<8x32xf32>
    %151 = arith.mulf %140, %150 : vector<8x32xf32>
    %152 = arith.addf %149, %151 : vector<8x32xf32>
    %153 = math.tanh %152 : vector<8x32xf32>
    %cst_29 = arith.constant 1.000000e+00 : f32
    %154 = vector.broadcast %cst_29 : f32 to vector<8x32xf32>
    %155 = arith.subf %154, %148 : vector<8x32xf32>
    %156 = arith.mulf %155, %153 : vector<8x32xf32>
    %157 = arith.mulf %148, %128 : vector<8x32xf32>
    %158 = arith.addf %156, %157 : vector<8x32xf32>
    %159 = vector.extract_strided_slice %7 {offsets = [40, 0], sizes = [8, 96], strides = [1, 1]} : vector<64x96xf32> to vector<8x96xf32>
    %cst_30 = arith.constant dense<0.000000e+00> : vector<8x96xf32>
    %160 = tpu.matmul %158, %2, %cst_30 {dimension_numbers = #tpu.dot_dimension_numbers<[1], [0], [0], [1], [0, 0, 1, 1], [], []>} : vector<8x32xf32>, vector<32x96xf32>, vector<8x96xf32> -> vector<8x96xf32>
    %161 = vector.broadcast %4 : vector<1x96xf32> to vector<8x96xf32>
    %162 = arith.addf %160, %161 : vector<8x96xf32>
    %163 = vector.extract_strided_slice %159 {offsets = [0, 0], sizes = [8, 32], strides = [1, 1]} : vector<8x96xf32> to vector<8x32xf32>
    %164 = vector.extract_strided_slice %162 {offsets = [0, 0], sizes = [8, 32], strides = [1, 1]} : vector<8x96xf32> to vector<8x32xf32>
    %165 = arith.addf %163, %164 : vector<8x32xf32>
    %166 = arith.negf %165 : vector<8x32xf32>
    %167 = math.exp %166 : vector<8x32xf32>
    %cst_31 = arith.constant 1.000000e+00 : f32
    %168 = vector.broadcast %cst_31 : f32 to vector<8x32xf32>
    %169 = arith.addf %168, %167 : vector<8x32xf32>
    %170 = arith.divf %168, %169 : vector<8x32xf32>
    %171 = vector.extract_strided_slice %159 {offsets = [0, 32], sizes = [8, 32], strides = [1, 1]} : vector<8x96xf32> to vector<8x32xf32>
    %172 = vector.extract_strided_slice %162 {offsets = [0, 32], sizes = [8, 32], strides = [1, 1]} : vector<8x96xf32> to vector<8x32xf32>
    %173 = arith.addf %171, %172 : vector<8x32xf32>
    %174 = arith.negf %173 : vector<8x32xf32>
    %175 = math.exp %174 : vector<8x32xf32>
    %cst_32 = arith.constant 1.000000e+00 : f32
    %176 = vector.broadcast %cst_32 : f32 to vector<8x32xf32>
    %177 = arith.addf %176, %175 : vector<8x32xf32>
    %178 = arith.divf %176, %177 : vector<8x32xf32>
    %179 = vector.extract_strided_slice %159 {offsets = [0, 64], sizes = [8, 32], strides = [1, 1]} : vector<8x96xf32> to vector<8x32xf32>
    %180 = vector.extract_strided_slice %162 {offsets = [0, 64], sizes = [8, 32], strides = [1, 1]} : vector<8x96xf32> to vector<8x32xf32>
    %181 = arith.mulf %170, %180 : vector<8x32xf32>
    %182 = arith.addf %179, %181 : vector<8x32xf32>
    %183 = math.tanh %182 : vector<8x32xf32>
    %cst_33 = arith.constant 1.000000e+00 : f32
    %184 = vector.broadcast %cst_33 : f32 to vector<8x32xf32>
    %185 = arith.subf %184, %178 : vector<8x32xf32>
    %186 = arith.mulf %185, %183 : vector<8x32xf32>
    %187 = arith.mulf %178, %158 : vector<8x32xf32>
    %188 = arith.addf %186, %187 : vector<8x32xf32>
    %189 = vector.extract_strided_slice %7 {offsets = [48, 0], sizes = [8, 96], strides = [1, 1]} : vector<64x96xf32> to vector<8x96xf32>
    %cst_34 = arith.constant dense<0.000000e+00> : vector<8x96xf32>
    %190 = tpu.matmul %188, %2, %cst_34 {dimension_numbers = #tpu.dot_dimension_numbers<[1], [0], [0], [1], [0, 0, 1, 1], [], []>} : vector<8x32xf32>, vector<32x96xf32>, vector<8x96xf32> -> vector<8x96xf32>
    %191 = vector.broadcast %4 : vector<1x96xf32> to vector<8x96xf32>
    %192 = arith.addf %190, %191 : vector<8x96xf32>
    %193 = vector.extract_strided_slice %189 {offsets = [0, 0], sizes = [8, 32], strides = [1, 1]} : vector<8x96xf32> to vector<8x32xf32>
    %194 = vector.extract_strided_slice %192 {offsets = [0, 0], sizes = [8, 32], strides = [1, 1]} : vector<8x96xf32> to vector<8x32xf32>
    %195 = arith.addf %193, %194 : vector<8x32xf32>
    %196 = arith.negf %195 : vector<8x32xf32>
    %197 = math.exp %196 : vector<8x32xf32>
    %cst_35 = arith.constant 1.000000e+00 : f32
    %198 = vector.broadcast %cst_35 : f32 to vector<8x32xf32>
    %199 = arith.addf %198, %197 : vector<8x32xf32>
    %200 = arith.divf %198, %199 : vector<8x32xf32>
    %201 = vector.extract_strided_slice %189 {offsets = [0, 32], sizes = [8, 32], strides = [1, 1]} : vector<8x96xf32> to vector<8x32xf32>
    %202 = vector.extract_strided_slice %192 {offsets = [0, 32], sizes = [8, 32], strides = [1, 1]} : vector<8x96xf32> to vector<8x32xf32>
    %203 = arith.addf %201, %202 : vector<8x32xf32>
    %204 = arith.negf %203 : vector<8x32xf32>
    %205 = math.exp %204 : vector<8x32xf32>
    %cst_36 = arith.constant 1.000000e+00 : f32
    %206 = vector.broadcast %cst_36 : f32 to vector<8x32xf32>
    %207 = arith.addf %206, %205 : vector<8x32xf32>
    %208 = arith.divf %206, %207 : vector<8x32xf32>
    %209 = vector.extract_strided_slice %189 {offsets = [0, 64], sizes = [8, 32], strides = [1, 1]} : vector<8x96xf32> to vector<8x32xf32>
    %210 = vector.extract_strided_slice %192 {offsets = [0, 64], sizes = [8, 32], strides = [1, 1]} : vector<8x96xf32> to vector<8x32xf32>
    %211 = arith.mulf %200, %210 : vector<8x32xf32>
    %212 = arith.addf %209, %211 : vector<8x32xf32>
    %213 = math.tanh %212 : vector<8x32xf32>
    %cst_37 = arith.constant 1.000000e+00 : f32
    %214 = vector.broadcast %cst_37 : f32 to vector<8x32xf32>
    %215 = arith.subf %214, %208 : vector<8x32xf32>
    %216 = arith.mulf %215, %213 : vector<8x32xf32>
    %217 = arith.mulf %208, %188 : vector<8x32xf32>
    %218 = arith.addf %216, %217 : vector<8x32xf32>
    %219 = vector.extract_strided_slice %7 {offsets = [56, 0], sizes = [8, 96], strides = [1, 1]} : vector<64x96xf32> to vector<8x96xf32>
    %cst_38 = arith.constant dense<0.000000e+00> : vector<8x96xf32>
    %220 = tpu.matmul %218, %2, %cst_38 {dimension_numbers = #tpu.dot_dimension_numbers<[1], [0], [0], [1], [0, 0, 1, 1], [], []>} : vector<8x32xf32>, vector<32x96xf32>, vector<8x96xf32> -> vector<8x96xf32>
    %221 = vector.broadcast %4 : vector<1x96xf32> to vector<8x96xf32>
    %222 = arith.addf %220, %221 : vector<8x96xf32>
    %223 = vector.extract_strided_slice %219 {offsets = [0, 0], sizes = [8, 32], strides = [1, 1]} : vector<8x96xf32> to vector<8x32xf32>
    %224 = vector.extract_strided_slice %222 {offsets = [0, 0], sizes = [8, 32], strides = [1, 1]} : vector<8x96xf32> to vector<8x32xf32>
    %225 = arith.addf %223, %224 : vector<8x32xf32>
    %226 = arith.negf %225 : vector<8x32xf32>
    %227 = math.exp %226 : vector<8x32xf32>
    %cst_39 = arith.constant 1.000000e+00 : f32
    %228 = vector.broadcast %cst_39 : f32 to vector<8x32xf32>
    %229 = arith.addf %228, %227 : vector<8x32xf32>
    %230 = arith.divf %228, %229 : vector<8x32xf32>
    %231 = vector.extract_strided_slice %219 {offsets = [0, 32], sizes = [8, 32], strides = [1, 1]} : vector<8x96xf32> to vector<8x32xf32>
    %232 = vector.extract_strided_slice %222 {offsets = [0, 32], sizes = [8, 32], strides = [1, 1]} : vector<8x96xf32> to vector<8x32xf32>
    %233 = arith.addf %231, %232 : vector<8x32xf32>
    %234 = arith.negf %233 : vector<8x32xf32>
    %235 = math.exp %234 : vector<8x32xf32>
    %cst_40 = arith.constant 1.000000e+00 : f32
    %236 = vector.broadcast %cst_40 : f32 to vector<8x32xf32>
    %237 = arith.addf %236, %235 : vector<8x32xf32>
    %238 = arith.divf %236, %237 : vector<8x32xf32>
    %239 = vector.extract_strided_slice %219 {offsets = [0, 64], sizes = [8, 32], strides = [1, 1]} : vector<8x96xf32> to vector<8x32xf32>
    %240 = vector.extract_strided_slice %222 {offsets = [0, 64], sizes = [8, 32], strides = [1, 1]} : vector<8x96xf32> to vector<8x32xf32>
    %241 = arith.mulf %230, %240 : vector<8x32xf32>
    %242 = arith.addf %239, %241 : vector<8x32xf32>
    %243 = math.tanh %242 : vector<8x32xf32>
    %cst_41 = arith.constant 1.000000e+00 : f32
    %244 = vector.broadcast %cst_41 : f32 to vector<8x32xf32>
    %245 = arith.subf %244, %238 : vector<8x32xf32>
    %246 = arith.mulf %245, %243 : vector<8x32xf32>
    %247 = arith.mulf %238, %218 : vector<8x32xf32>
    %248 = arith.addf %246, %247 : vector<8x32xf32>
    %249 = tpu.concatenate %38, %68, %98, %128, %158, %188, %218, %248 in 0 : vector<8x32xf32>, vector<8x32xf32>, vector<8x32xf32>, vector<8x32xf32>, vector<8x32xf32>, vector<8x32xf32>, vector<8x32xf32>, vector<8x32xf32> -> vector<64x32xf32>
    %c0_42 = arith.constant 0 : index
    %c0_43 = arith.constant 0 : index
    %250 = vector.load %arg5[%c0_42, %c0_43] : memref<32x96xf32, #tpu.memory_space<vmem>>, vector<32x96xf32>
    %c0_44 = arith.constant 0 : index
    %c0_45 = arith.constant 0 : index
    %251 = vector.load %arg6[%c0_44, %c0_45] : memref<32x96xf32, #tpu.memory_space<vmem>>, vector<32x96xf32>
    %c0_46 = arith.constant 0 : index
    %c0_47 = arith.constant 0 : index
    %252 = vector.load %arg7[%c0_46, %c0_47] : memref<1x96xf32, #tpu.memory_space<vmem>>, vector<1x96xf32>
    %c0_48 = arith.constant 0 : index
    %c0_49 = arith.constant 0 : index
    %253 = vector.load %arg8[%c0_48, %c0_49] : memref<1x96xf32, #tpu.memory_space<vmem>>, vector<1x96xf32>
    %cst_50 = arith.constant dense<0.000000e+00> : vector<64x96xf32>
    %254 = tpu.matmul %249, %250, %cst_50 {dimension_numbers = #tpu.dot_dimension_numbers<[1], [0], [0], [1], [0, 0, 1, 1], [], []>} : vector<64x32xf32>, vector<32x96xf32>, vector<64x96xf32> -> vector<64x96xf32>
    %255 = vector.broadcast %252 : vector<1x96xf32> to vector<64x96xf32>
    %256 = arith.addf %254, %255 : vector<64x96xf32>
    %cst_51 = arith.constant 0.000000e+00 : f32
    %257 = vector.broadcast %cst_51 : f32 to vector<8x32xf32>
    %258 = vector.extract_strided_slice %256 {offsets = [0, 0], sizes = [8, 96], strides = [1, 1]} : vector<64x96xf32> to vector<8x96xf32>
    %cst_52 = arith.constant dense<0.000000e+00> : vector<8x96xf32>
    %259 = tpu.matmul %257, %251, %cst_52 {dimension_numbers = #tpu.dot_dimension_numbers<[1], [0], [0], [1], [0, 0, 1, 1], [], []>} : vector<8x32xf32>, vector<32x96xf32>, vector<8x96xf32> -> vector<8x96xf32>
    %260 = vector.broadcast %253 : vector<1x96xf32> to vector<8x96xf32>
    %261 = arith.addf %259, %260 : vector<8x96xf32>
    %262 = vector.extract_strided_slice %258 {offsets = [0, 0], sizes = [8, 32], strides = [1, 1]} : vector<8x96xf32> to vector<8x32xf32>
    %263 = vector.extract_strided_slice %261 {offsets = [0, 0], sizes = [8, 32], strides = [1, 1]} : vector<8x96xf32> to vector<8x32xf32>
    %264 = arith.addf %262, %263 : vector<8x32xf32>
    %265 = arith.negf %264 : vector<8x32xf32>
    %266 = math.exp %265 : vector<8x32xf32>
    %cst_53 = arith.constant 1.000000e+00 : f32
    %267 = vector.broadcast %cst_53 : f32 to vector<8x32xf32>
    %268 = arith.addf %267, %266 : vector<8x32xf32>
    %269 = arith.divf %267, %268 : vector<8x32xf32>
    %270 = vector.extract_strided_slice %258 {offsets = [0, 32], sizes = [8, 32], strides = [1, 1]} : vector<8x96xf32> to vector<8x32xf32>
    %271 = vector.extract_strided_slice %261 {offsets = [0, 32], sizes = [8, 32], strides = [1, 1]} : vector<8x96xf32> to vector<8x32xf32>
    %272 = arith.addf %270, %271 : vector<8x32xf32>
    %273 = arith.negf %272 : vector<8x32xf32>
    %274 = math.exp %273 : vector<8x32xf32>
    %cst_54 = arith.constant 1.000000e+00 : f32
    %275 = vector.broadcast %cst_54 : f32 to vector<8x32xf32>
    %276 = arith.addf %275, %274 : vector<8x32xf32>
    %277 = arith.divf %275, %276 : vector<8x32xf32>
    %278 = vector.extract_strided_slice %258 {offsets = [0, 64], sizes = [8, 32], strides = [1, 1]} : vector<8x96xf32> to vector<8x32xf32>
    %279 = vector.extract_strided_slice %261 {offsets = [0, 64], sizes = [8, 32], strides = [1, 1]} : vector<8x96xf32> to vector<8x32xf32>
    %280 = arith.mulf %269, %279 : vector<8x32xf32>
    %281 = arith.addf %278, %280 : vector<8x32xf32>
    %282 = math.tanh %281 : vector<8x32xf32>
    %cst_55 = arith.constant 1.000000e+00 : f32
    %283 = vector.broadcast %cst_55 : f32 to vector<8x32xf32>
    %284 = arith.subf %283, %277 : vector<8x32xf32>
    %285 = arith.mulf %284, %282 : vector<8x32xf32>
    %286 = arith.mulf %277, %257 : vector<8x32xf32>
    %287 = arith.addf %285, %286 : vector<8x32xf32>
    %288 = vector.extract_strided_slice %256 {offsets = [8, 0], sizes = [8, 96], strides = [1, 1]} : vector<64x96xf32> to vector<8x96xf32>
    %cst_56 = arith.constant dense<0.000000e+00> : vector<8x96xf32>
    %289 = tpu.matmul %287, %251, %cst_56 {dimension_numbers = #tpu.dot_dimension_numbers<[1], [0], [0], [1], [0, 0, 1, 1], [], []>} : vector<8x32xf32>, vector<32x96xf32>, vector<8x96xf32> -> vector<8x96xf32>
    %290 = vector.broadcast %253 : vector<1x96xf32> to vector<8x96xf32>
    %291 = arith.addf %289, %290 : vector<8x96xf32>
    %292 = vector.extract_strided_slice %288 {offsets = [0, 0], sizes = [8, 32], strides = [1, 1]} : vector<8x96xf32> to vector<8x32xf32>
    %293 = vector.extract_strided_slice %291 {offsets = [0, 0], sizes = [8, 32], strides = [1, 1]} : vector<8x96xf32> to vector<8x32xf32>
    %294 = arith.addf %292, %293 : vector<8x32xf32>
    %295 = arith.negf %294 : vector<8x32xf32>
    %296 = math.exp %295 : vector<8x32xf32>
    %cst_57 = arith.constant 1.000000e+00 : f32
    %297 = vector.broadcast %cst_57 : f32 to vector<8x32xf32>
    %298 = arith.addf %297, %296 : vector<8x32xf32>
    %299 = arith.divf %297, %298 : vector<8x32xf32>
    %300 = vector.extract_strided_slice %288 {offsets = [0, 32], sizes = [8, 32], strides = [1, 1]} : vector<8x96xf32> to vector<8x32xf32>
    %301 = vector.extract_strided_slice %291 {offsets = [0, 32], sizes = [8, 32], strides = [1, 1]} : vector<8x96xf32> to vector<8x32xf32>
    %302 = arith.addf %300, %301 : vector<8x32xf32>
    %303 = arith.negf %302 : vector<8x32xf32>
    %304 = math.exp %303 : vector<8x32xf32>
    %cst_58 = arith.constant 1.000000e+00 : f32
    %305 = vector.broadcast %cst_58 : f32 to vector<8x32xf32>
    %306 = arith.addf %305, %304 : vector<8x32xf32>
    %307 = arith.divf %305, %306 : vector<8x32xf32>
    %308 = vector.extract_strided_slice %288 {offsets = [0, 64], sizes = [8, 32], strides = [1, 1]} : vector<8x96xf32> to vector<8x32xf32>
    %309 = vector.extract_strided_slice %291 {offsets = [0, 64], sizes = [8, 32], strides = [1, 1]} : vector<8x96xf32> to vector<8x32xf32>
    %310 = arith.mulf %299, %309 : vector<8x32xf32>
    %311 = arith.addf %308, %310 : vector<8x32xf32>
    %312 = math.tanh %311 : vector<8x32xf32>
    %cst_59 = arith.constant 1.000000e+00 : f32
    %313 = vector.broadcast %cst_59 : f32 to vector<8x32xf32>
    %314 = arith.subf %313, %307 : vector<8x32xf32>
    %315 = arith.mulf %314, %312 : vector<8x32xf32>
    %316 = arith.mulf %307, %287 : vector<8x32xf32>
    %317 = arith.addf %315, %316 : vector<8x32xf32>
    %318 = vector.extract_strided_slice %256 {offsets = [16, 0], sizes = [8, 96], strides = [1, 1]} : vector<64x96xf32> to vector<8x96xf32>
    %cst_60 = arith.constant dense<0.000000e+00> : vector<8x96xf32>
    %319 = tpu.matmul %317, %251, %cst_60 {dimension_numbers = #tpu.dot_dimension_numbers<[1], [0], [0], [1], [0, 0, 1, 1], [], []>} : vector<8x32xf32>, vector<32x96xf32>, vector<8x96xf32> -> vector<8x96xf32>
    %320 = vector.broadcast %253 : vector<1x96xf32> to vector<8x96xf32>
    %321 = arith.addf %319, %320 : vector<8x96xf32>
    %322 = vector.extract_strided_slice %318 {offsets = [0, 0], sizes = [8, 32], strides = [1, 1]} : vector<8x96xf32> to vector<8x32xf32>
    %323 = vector.extract_strided_slice %321 {offsets = [0, 0], sizes = [8, 32], strides = [1, 1]} : vector<8x96xf32> to vector<8x32xf32>
    %324 = arith.addf %322, %323 : vector<8x32xf32>
    %325 = arith.negf %324 : vector<8x32xf32>
    %326 = math.exp %325 : vector<8x32xf32>
    %cst_61 = arith.constant 1.000000e+00 : f32
    %327 = vector.broadcast %cst_61 : f32 to vector<8x32xf32>
    %328 = arith.addf %327, %326 : vector<8x32xf32>
    %329 = arith.divf %327, %328 : vector<8x32xf32>
    %330 = vector.extract_strided_slice %318 {offsets = [0, 32], sizes = [8, 32], strides = [1, 1]} : vector<8x96xf32> to vector<8x32xf32>
    %331 = vector.extract_strided_slice %321 {offsets = [0, 32], sizes = [8, 32], strides = [1, 1]} : vector<8x96xf32> to vector<8x32xf32>
    %332 = arith.addf %330, %331 : vector<8x32xf32>
    %333 = arith.negf %332 : vector<8x32xf32>
    %334 = math.exp %333 : vector<8x32xf32>
    %cst_62 = arith.constant 1.000000e+00 : f32
    %335 = vector.broadcast %cst_62 : f32 to vector<8x32xf32>
    %336 = arith.addf %335, %334 : vector<8x32xf32>
    %337 = arith.divf %335, %336 : vector<8x32xf32>
    %338 = vector.extract_strided_slice %318 {offsets = [0, 64], sizes = [8, 32], strides = [1, 1]} : vector<8x96xf32> to vector<8x32xf32>
    %339 = vector.extract_strided_slice %321 {offsets = [0, 64], sizes = [8, 32], strides = [1, 1]} : vector<8x96xf32> to vector<8x32xf32>
    %340 = arith.mulf %329, %339 : vector<8x32xf32>
    %341 = arith.addf %338, %340 : vector<8x32xf32>
    %342 = math.tanh %341 : vector<8x32xf32>
    %cst_63 = arith.constant 1.000000e+00 : f32
    %343 = vector.broadcast %cst_63 : f32 to vector<8x32xf32>
    %344 = arith.subf %343, %337 : vector<8x32xf32>
    %345 = arith.mulf %344, %342 : vector<8x32xf32>
    %346 = arith.mulf %337, %317 : vector<8x32xf32>
    %347 = arith.addf %345, %346 : vector<8x32xf32>
    %348 = vector.extract_strided_slice %256 {offsets = [24, 0], sizes = [8, 96], strides = [1, 1]} : vector<64x96xf32> to vector<8x96xf32>
    %cst_64 = arith.constant dense<0.000000e+00> : vector<8x96xf32>
    %349 = tpu.matmul %347, %251, %cst_64 {dimension_numbers = #tpu.dot_dimension_numbers<[1], [0], [0], [1], [0, 0, 1, 1], [], []>} : vector<8x32xf32>, vector<32x96xf32>, vector<8x96xf32> -> vector<8x96xf32>
    %350 = vector.broadcast %253 : vector<1x96xf32> to vector<8x96xf32>
    %351 = arith.addf %349, %350 : vector<8x96xf32>
    %352 = vector.extract_strided_slice %348 {offsets = [0, 0], sizes = [8, 32], strides = [1, 1]} : vector<8x96xf32> to vector<8x32xf32>
    %353 = vector.extract_strided_slice %351 {offsets = [0, 0], sizes = [8, 32], strides = [1, 1]} : vector<8x96xf32> to vector<8x32xf32>
    %354 = arith.addf %352, %353 : vector<8x32xf32>
    %355 = arith.negf %354 : vector<8x32xf32>
    %356 = math.exp %355 : vector<8x32xf32>
    %cst_65 = arith.constant 1.000000e+00 : f32
    %357 = vector.broadcast %cst_65 : f32 to vector<8x32xf32>
    %358 = arith.addf %357, %356 : vector<8x32xf32>
    %359 = arith.divf %357, %358 : vector<8x32xf32>
    %360 = vector.extract_strided_slice %348 {offsets = [0, 32], sizes = [8, 32], strides = [1, 1]} : vector<8x96xf32> to vector<8x32xf32>
    %361 = vector.extract_strided_slice %351 {offsets = [0, 32], sizes = [8, 32], strides = [1, 1]} : vector<8x96xf32> to vector<8x32xf32>
    %362 = arith.addf %360, %361 : vector<8x32xf32>
    %363 = arith.negf %362 : vector<8x32xf32>
    %364 = math.exp %363 : vector<8x32xf32>
    %cst_66 = arith.constant 1.000000e+00 : f32
    %365 = vector.broadcast %cst_66 : f32 to vector<8x32xf32>
    %366 = arith.addf %365, %364 : vector<8x32xf32>
    %367 = arith.divf %365, %366 : vector<8x32xf32>
    %368 = vector.extract_strided_slice %348 {offsets = [0, 64], sizes = [8, 32], strides = [1, 1]} : vector<8x96xf32> to vector<8x32xf32>
    %369 = vector.extract_strided_slice %351 {offsets = [0, 64], sizes = [8, 32], strides = [1, 1]} : vector<8x96xf32> to vector<8x32xf32>
    %370 = arith.mulf %359, %369 : vector<8x32xf32>
    %371 = arith.addf %368, %370 : vector<8x32xf32>
    %372 = math.tanh %371 : vector<8x32xf32>
    %cst_67 = arith.constant 1.000000e+00 : f32
    %373 = vector.broadcast %cst_67 : f32 to vector<8x32xf32>
    %374 = arith.subf %373, %367 : vector<8x32xf32>
    %375 = arith.mulf %374, %372 : vector<8x32xf32>
    %376 = arith.mulf %367, %347 : vector<8x32xf32>
    %377 = arith.addf %375, %376 : vector<8x32xf32>
    %378 = vector.extract_strided_slice %256 {offsets = [32, 0], sizes = [8, 96], strides = [1, 1]} : vector<64x96xf32> to vector<8x96xf32>
    %cst_68 = arith.constant dense<0.000000e+00> : vector<8x96xf32>
    %379 = tpu.matmul %377, %251, %cst_68 {dimension_numbers = #tpu.dot_dimension_numbers<[1], [0], [0], [1], [0, 0, 1, 1], [], []>} : vector<8x32xf32>, vector<32x96xf32>, vector<8x96xf32> -> vector<8x96xf32>
    %380 = vector.broadcast %253 : vector<1x96xf32> to vector<8x96xf32>
    %381 = arith.addf %379, %380 : vector<8x96xf32>
    %382 = vector.extract_strided_slice %378 {offsets = [0, 0], sizes = [8, 32], strides = [1, 1]} : vector<8x96xf32> to vector<8x32xf32>
    %383 = vector.extract_strided_slice %381 {offsets = [0, 0], sizes = [8, 32], strides = [1, 1]} : vector<8x96xf32> to vector<8x32xf32>
    %384 = arith.addf %382, %383 : vector<8x32xf32>
    %385 = arith.negf %384 : vector<8x32xf32>
    %386 = math.exp %385 : vector<8x32xf32>
    %cst_69 = arith.constant 1.000000e+00 : f32
    %387 = vector.broadcast %cst_69 : f32 to vector<8x32xf32>
    %388 = arith.addf %387, %386 : vector<8x32xf32>
    %389 = arith.divf %387, %388 : vector<8x32xf32>
    %390 = vector.extract_strided_slice %378 {offsets = [0, 32], sizes = [8, 32], strides = [1, 1]} : vector<8x96xf32> to vector<8x32xf32>
    %391 = vector.extract_strided_slice %381 {offsets = [0, 32], sizes = [8, 32], strides = [1, 1]} : vector<8x96xf32> to vector<8x32xf32>
    %392 = arith.addf %390, %391 : vector<8x32xf32>
    %393 = arith.negf %392 : vector<8x32xf32>
    %394 = math.exp %393 : vector<8x32xf32>
    %cst_70 = arith.constant 1.000000e+00 : f32
    %395 = vector.broadcast %cst_70 : f32 to vector<8x32xf32>
    %396 = arith.addf %395, %394 : vector<8x32xf32>
    %397 = arith.divf %395, %396 : vector<8x32xf32>
    %398 = vector.extract_strided_slice %378 {offsets = [0, 64], sizes = [8, 32], strides = [1, 1]} : vector<8x96xf32> to vector<8x32xf32>
    %399 = vector.extract_strided_slice %381 {offsets = [0, 64], sizes = [8, 32], strides = [1, 1]} : vector<8x96xf32> to vector<8x32xf32>
    %400 = arith.mulf %389, %399 : vector<8x32xf32>
    %401 = arith.addf %398, %400 : vector<8x32xf32>
    %402 = math.tanh %401 : vector<8x32xf32>
    %cst_71 = arith.constant 1.000000e+00 : f32
    %403 = vector.broadcast %cst_71 : f32 to vector<8x32xf32>
    %404 = arith.subf %403, %397 : vector<8x32xf32>
    %405 = arith.mulf %404, %402 : vector<8x32xf32>
    %406 = arith.mulf %397, %377 : vector<8x32xf32>
    %407 = arith.addf %405, %406 : vector<8x32xf32>
    %408 = vector.extract_strided_slice %256 {offsets = [40, 0], sizes = [8, 96], strides = [1, 1]} : vector<64x96xf32> to vector<8x96xf32>
    %cst_72 = arith.constant dense<0.000000e+00> : vector<8x96xf32>
    %409 = tpu.matmul %407, %251, %cst_72 {dimension_numbers = #tpu.dot_dimension_numbers<[1], [0], [0], [1], [0, 0, 1, 1], [], []>} : vector<8x32xf32>, vector<32x96xf32>, vector<8x96xf32> -> vector<8x96xf32>
    %410 = vector.broadcast %253 : vector<1x96xf32> to vector<8x96xf32>
    %411 = arith.addf %409, %410 : vector<8x96xf32>
    %412 = vector.extract_strided_slice %408 {offsets = [0, 0], sizes = [8, 32], strides = [1, 1]} : vector<8x96xf32> to vector<8x32xf32>
    %413 = vector.extract_strided_slice %411 {offsets = [0, 0], sizes = [8, 32], strides = [1, 1]} : vector<8x96xf32> to vector<8x32xf32>
    %414 = arith.addf %412, %413 : vector<8x32xf32>
    %415 = arith.negf %414 : vector<8x32xf32>
    %416 = math.exp %415 : vector<8x32xf32>
    %cst_73 = arith.constant 1.000000e+00 : f32
    %417 = vector.broadcast %cst_73 : f32 to vector<8x32xf32>
    %418 = arith.addf %417, %416 : vector<8x32xf32>
    %419 = arith.divf %417, %418 : vector<8x32xf32>
    %420 = vector.extract_strided_slice %408 {offsets = [0, 32], sizes = [8, 32], strides = [1, 1]} : vector<8x96xf32> to vector<8x32xf32>
    %421 = vector.extract_strided_slice %411 {offsets = [0, 32], sizes = [8, 32], strides = [1, 1]} : vector<8x96xf32> to vector<8x32xf32>
    %422 = arith.addf %420, %421 : vector<8x32xf32>
    %423 = arith.negf %422 : vector<8x32xf32>
    %424 = math.exp %423 : vector<8x32xf32>
    %cst_74 = arith.constant 1.000000e+00 : f32
    %425 = vector.broadcast %cst_74 : f32 to vector<8x32xf32>
    %426 = arith.addf %425, %424 : vector<8x32xf32>
    %427 = arith.divf %425, %426 : vector<8x32xf32>
    %428 = vector.extract_strided_slice %408 {offsets = [0, 64], sizes = [8, 32], strides = [1, 1]} : vector<8x96xf32> to vector<8x32xf32>
    %429 = vector.extract_strided_slice %411 {offsets = [0, 64], sizes = [8, 32], strides = [1, 1]} : vector<8x96xf32> to vector<8x32xf32>
    %430 = arith.mulf %419, %429 : vector<8x32xf32>
    %431 = arith.addf %428, %430 : vector<8x32xf32>
    %432 = math.tanh %431 : vector<8x32xf32>
    %cst_75 = arith.constant 1.000000e+00 : f32
    %433 = vector.broadcast %cst_75 : f32 to vector<8x32xf32>
    %434 = arith.subf %433, %427 : vector<8x32xf32>
    %435 = arith.mulf %434, %432 : vector<8x32xf32>
    %436 = arith.mulf %427, %407 : vector<8x32xf32>
    %437 = arith.addf %435, %436 : vector<8x32xf32>
    %438 = vector.extract_strided_slice %256 {offsets = [48, 0], sizes = [8, 96], strides = [1, 1]} : vector<64x96xf32> to vector<8x96xf32>
    %cst_76 = arith.constant dense<0.000000e+00> : vector<8x96xf32>
    %439 = tpu.matmul %437, %251, %cst_76 {dimension_numbers = #tpu.dot_dimension_numbers<[1], [0], [0], [1], [0, 0, 1, 1], [], []>} : vector<8x32xf32>, vector<32x96xf32>, vector<8x96xf32> -> vector<8x96xf32>
    %440 = vector.broadcast %253 : vector<1x96xf32> to vector<8x96xf32>
    %441 = arith.addf %439, %440 : vector<8x96xf32>
    %442 = vector.extract_strided_slice %438 {offsets = [0, 0], sizes = [8, 32], strides = [1, 1]} : vector<8x96xf32> to vector<8x32xf32>
    %443 = vector.extract_strided_slice %441 {offsets = [0, 0], sizes = [8, 32], strides = [1, 1]} : vector<8x96xf32> to vector<8x32xf32>
    %444 = arith.addf %442, %443 : vector<8x32xf32>
    %445 = arith.negf %444 : vector<8x32xf32>
    %446 = math.exp %445 : vector<8x32xf32>
    %cst_77 = arith.constant 1.000000e+00 : f32
    %447 = vector.broadcast %cst_77 : f32 to vector<8x32xf32>
    %448 = arith.addf %447, %446 : vector<8x32xf32>
    %449 = arith.divf %447, %448 : vector<8x32xf32>
    %450 = vector.extract_strided_slice %438 {offsets = [0, 32], sizes = [8, 32], strides = [1, 1]} : vector<8x96xf32> to vector<8x32xf32>
    %451 = vector.extract_strided_slice %441 {offsets = [0, 32], sizes = [8, 32], strides = [1, 1]} : vector<8x96xf32> to vector<8x32xf32>
    %452 = arith.addf %450, %451 : vector<8x32xf32>
    %453 = arith.negf %452 : vector<8x32xf32>
    %454 = math.exp %453 : vector<8x32xf32>
    %cst_78 = arith.constant 1.000000e+00 : f32
    %455 = vector.broadcast %cst_78 : f32 to vector<8x32xf32>
    %456 = arith.addf %455, %454 : vector<8x32xf32>
    %457 = arith.divf %455, %456 : vector<8x32xf32>
    %458 = vector.extract_strided_slice %438 {offsets = [0, 64], sizes = [8, 32], strides = [1, 1]} : vector<8x96xf32> to vector<8x32xf32>
    %459 = vector.extract_strided_slice %441 {offsets = [0, 64], sizes = [8, 32], strides = [1, 1]} : vector<8x96xf32> to vector<8x32xf32>
    %460 = arith.mulf %449, %459 : vector<8x32xf32>
    %461 = arith.addf %458, %460 : vector<8x32xf32>
    %462 = math.tanh %461 : vector<8x32xf32>
    %cst_79 = arith.constant 1.000000e+00 : f32
    %463 = vector.broadcast %cst_79 : f32 to vector<8x32xf32>
    %464 = arith.subf %463, %457 : vector<8x32xf32>
    %465 = arith.mulf %464, %462 : vector<8x32xf32>
    %466 = arith.mulf %457, %437 : vector<8x32xf32>
    %467 = arith.addf %465, %466 : vector<8x32xf32>
    %468 = vector.extract_strided_slice %256 {offsets = [56, 0], sizes = [8, 96], strides = [1, 1]} : vector<64x96xf32> to vector<8x96xf32>
    %cst_80 = arith.constant dense<0.000000e+00> : vector<8x96xf32>
    %469 = tpu.matmul %467, %251, %cst_80 {dimension_numbers = #tpu.dot_dimension_numbers<[1], [0], [0], [1], [0, 0, 1, 1], [], []>} : vector<8x32xf32>, vector<32x96xf32>, vector<8x96xf32> -> vector<8x96xf32>
    %470 = vector.broadcast %253 : vector<1x96xf32> to vector<8x96xf32>
    %471 = arith.addf %469, %470 : vector<8x96xf32>
    %472 = vector.extract_strided_slice %468 {offsets = [0, 0], sizes = [8, 32], strides = [1, 1]} : vector<8x96xf32> to vector<8x32xf32>
    %473 = vector.extract_strided_slice %471 {offsets = [0, 0], sizes = [8, 32], strides = [1, 1]} : vector<8x96xf32> to vector<8x32xf32>
    %474 = arith.addf %472, %473 : vector<8x32xf32>
    %475 = arith.negf %474 : vector<8x32xf32>
    %476 = math.exp %475 : vector<8x32xf32>
    %cst_81 = arith.constant 1.000000e+00 : f32
    %477 = vector.broadcast %cst_81 : f32 to vector<8x32xf32>
    %478 = arith.addf %477, %476 : vector<8x32xf32>
    %479 = arith.divf %477, %478 : vector<8x32xf32>
    %480 = vector.extract_strided_slice %468 {offsets = [0, 32], sizes = [8, 32], strides = [1, 1]} : vector<8x96xf32> to vector<8x32xf32>
    %481 = vector.extract_strided_slice %471 {offsets = [0, 32], sizes = [8, 32], strides = [1, 1]} : vector<8x96xf32> to vector<8x32xf32>
    %482 = arith.addf %480, %481 : vector<8x32xf32>
    %483 = arith.negf %482 : vector<8x32xf32>
    %484 = math.exp %483 : vector<8x32xf32>
    %cst_82 = arith.constant 1.000000e+00 : f32
    %485 = vector.broadcast %cst_82 : f32 to vector<8x32xf32>
    %486 = arith.addf %485, %484 : vector<8x32xf32>
    %487 = arith.divf %485, %486 : vector<8x32xf32>
    %488 = vector.extract_strided_slice %468 {offsets = [0, 64], sizes = [8, 32], strides = [1, 1]} : vector<8x96xf32> to vector<8x32xf32>
    %489 = vector.extract_strided_slice %471 {offsets = [0, 64], sizes = [8, 32], strides = [1, 1]} : vector<8x96xf32> to vector<8x32xf32>
    %490 = arith.mulf %479, %489 : vector<8x32xf32>
    %491 = arith.addf %488, %490 : vector<8x32xf32>
    %492 = math.tanh %491 : vector<8x32xf32>
    %cst_83 = arith.constant 1.000000e+00 : f32
    %493 = vector.broadcast %cst_83 : f32 to vector<8x32xf32>
    %494 = arith.subf %493, %487 : vector<8x32xf32>
    %495 = arith.mulf %494, %492 : vector<8x32xf32>
    %496 = arith.mulf %487, %467 : vector<8x32xf32>
    %497 = arith.addf %495, %496 : vector<8x32xf32>
    %c0_84 = arith.constant 0 : index
    %c0_85 = arith.constant 0 : index
    %498 = vector.load %arg9[%c0_84, %c0_85] : memref<32x1xf32, #tpu.memory_space<vmem>>, vector<32x1xf32>
    %cst_86 = arith.constant dense<0.000000e+00> : vector<8x1xf32>
    %499 = tpu.matmul %497, %498, %cst_86 {dimension_numbers = #tpu.dot_dimension_numbers<[1], [0], [0], [1], [0, 0, 1, 1], [], []>} : vector<8x32xf32>, vector<32x1xf32>, vector<8x1xf32> -> vector<8x1xf32>
    %c0_87 = arith.constant 0 : index
    %c0_88 = arith.constant 0 : index
    %500 = vector.load %arg10[%c0_87, %c0_88] : memref<1x1xf32, #tpu.memory_space<vmem>>, vector<1x1xf32>
    %501 = vector.broadcast %500 : vector<1x1xf32> to vector<8x1xf32>
    %502 = arith.addf %499, %501 : vector<8x1xf32>
    %c0_89 = arith.constant 0 : index
    %c0_90 = arith.constant 0 : index
    %503 = vector.load %arg11[%c0_89, %c0_90] : memref<8x1xf32, #tpu.memory_space<vmem>>, vector<8x1xf32>
    tpu.vector_store %arg11[%c0_89, %c0_90], %502 {strides = array<i32>} : memref<8x1xf32, #tpu.memory_space<vmem>>, vector<8x1xf32>,
    return
  }
}

</mosaic_0001>

<llo_original>
// kernel: tpu_custom_call.1
$region0: #{tpu_custom_call.1}
  #allocation0 [shape = 'u32[]', space=smem, size = 0x4, offset = 0x4, fixed_abs, tag = 'smem constant byte address 0x4 - core index']
  #allocation1 [shape = 'u32[72,128]{1,0:T(1,128)}', space=vmem, size = 0x9000, scoped, tag = 'internal scratch']
  #allocation2 [shape = 'f32[1,1]{1,0:T(1,128)S(1)}', space=vmem, size = 0x200, scoped, tag = 'scoped memory for tpu_custom_call.1']
  %s0 = inlined_call_operand.vmem [shape: f32[64,6], index: 0, kind: input, shape index: {}]
  %s1 = inlined_call_operand.hbm [shape: f32[6,96], index: 1, kind: input, shape index: {}]
  %s2 = inlined_call_operand.vmem [shape: f32[32,96], index: 2, kind: input, shape index: {}]
  %s3 = inlined_call_operand.vmem [shape: f32[1,96], index: 3, kind: input, shape index: {}]
  %s4 = inlined_call_operand.vmem [shape: f32[1,96], index: 4, kind: input, shape index: {}]
  %s5 = inlined_call_operand.vmem [shape: f32[32,96], index: 5, kind: input, shape index: {}]
  %s6 = inlined_call_operand.vmem [shape: f32[32,96], index: 6, kind: input, shape index: {}]
  %s7 = inlined_call_operand.vmem [shape: f32[1,96], index: 7, kind: input, shape index: {}]
  %s8 = inlined_call_operand.vmem [shape: f32[1,96], index: 8, kind: input, shape index: {}]
  %s9 = inlined_call_operand.vmem [shape: f32[32,1], index: 9, kind: input, shape index: {}]
  %s10 = inlined_call_operand.<no memory space> [shape: f32[1,1], index: 10, kind: input, shape index: {}]
  %s11 = inlined_call_operand.vmem [shape: f32[8,1], index: 11, kind: output, shape index: {}]
  %s12 = sld [smem:[#allocation0]]
  $region58: #{tpu_custom_call.1} parent=0
    _
  %s14 = ssub.s32 1, %s12
  %s15 = scalar_select 0, %s14, %s12
  %v16 = vstv %s10
  %17 = vst [vmem:[#allocation2] sm:$0x1] %v16
  $region1: #{tpu_custom_call.1} parent=0
    #allocation3 [shape = 'u8[4096]{0}', space=vmem, size = 0x1000, scoped, tag = 'input window, operand 1, single buffered']
    #allocation4 [shape = 's32[1]{0}', space=sflag, size = 0x4, scoped, tag = 'scoped memory for tpu_custom_call.1']
    %18 = vsyncpa [#allocation4], 0
    // Predicated region
    $region2: #{tpu_custom_call.1} parent=1 // pred_check
      _
    $region3: #{tpu_custom_call.1} parent=1 // pred_check_branch
      %20 = sbr.rel (0) target = $region5
    $region4: #{tpu_custom_call.1} parent=1 // pred_region
      _
    $region5: #{tpu_custom_call.1} parent=1 // pred_fallthru
      _
    // Predicated region
    $region6: #{tpu_custom_call.1} parent=1 // pred_check
      _
    $region7: #{tpu_custom_call.1} parent=1 // pred_check_branch
      %22 = sbr.rel (0) target = $region9
    $region8: #{tpu_custom_call.1} parent=1 // pred_region
      %24 = vsyncadd [#allocation4], 0
      %s26 = sshll.u32 %s1, 4
      %s27 = int_to_ptr.hbm [resolvable:$true] %s26
      %s28 = sshll.u32 [#allocation3], 4
      %s29 = int_to_ptr.vmem [resolvable:$true] %s28
      %31 = dma.hbm_to_vmem [thread:$0]  %s27, 128, %s29, [#allocation4]
    $region9: #{tpu_custom_call.1} parent=1 // pred_fallthru
      _
    // Predicated region
    $region10: #{tpu_custom_call.1} parent=1 // pred_check
      _
    $region11: #{tpu_custom_call.1} parent=1 // pred_check_branch
      %33 = sbr.rel (0) target = $region13
    $region12: #{tpu_custom_call.1} parent=1 // pred_region
      _
    $region13: #{tpu_custom_call.1} parent=1 // pred_fallthru
      _
    // Predicated region
    $region14: #{tpu_custom_call.1} parent=1 // pred_check
      _
    $region15: #{tpu_custom_call.1} parent=1 // pred_check_branch
      %35 = sbr.rel (0) target = $region17
    $region16: #{tpu_custom_call.1} parent=1 // pred_region
      _
    $region17: #{tpu_custom_call.1} parent=1 // pred_fallthru
      _
    // Predicated region
    $region18: #{tpu_custom_call.1} parent=1 // pred_check
      _
    $region19: #{tpu_custom_call.1} parent=1 // pred_check_branch
      %37 = sbr.rel (0) target = $region21
    $region20: #{tpu_custom_call.1} parent=1 // pred_region
      _
    $region21: #{tpu_custom_call.1} parent=1 // pred_fallthru
      _
    // Predicated region
    $region22: #{tpu_custom_call.1} parent=1 // pred_check
      _
    $region23: #{tpu_custom_call.1} parent=1 // pred_check_branch
      %39 = sbr.rel (0) target = $region25
    $region24: #{tpu_custom_call.1} parent=1 // pred_region
      _
    $region25: #{tpu_custom_call.1} parent=1 // pred_fallthru
      _
    // Predicated region
    $region26: #{tpu_custom_call.1} parent=1 // pred_check
      _
    $region27: #{tpu_custom_call.1} parent=1 // pred_check_branch
      %41 = sbr.rel (0) target = $region29
    $region28: #{tpu_custom_call.1} parent=1 // pred_region
      _
    $region29: #{tpu_custom_call.1} parent=1 // pred_fallthru
      _
    // Predicated region
    $region30: #{tpu_custom_call.1} parent=1 // pred_check
      _
    $region31: #{tpu_custom_call.1} parent=1 // pred_check_branch
      %43 = sbr.rel (0) target = $region33
    $region32: #{tpu_custom_call.1} parent=1 // pred_region
      _
    $region33: #{tpu_custom_call.1} parent=1 // pred_fallthru
      _
    // Predicated region
    $region34: #{tpu_custom_call.1} parent=1 // pred_check
      _
    $region35: #{tpu_custom_call.1} parent=1 // pred_check_branch
      %45 = sbr.rel (0) target = $region37
    $region36: #{tpu_custom_call.1} parent=1 // pred_region
      _
    $region37: #{tpu_custom_call.1} parent=1 // pred_fallthru
      _
    // Predicated region
    $region38: #{tpu_custom_call.1} parent=1 // pred_check
      _
    $region39: #{tpu_custom_call.1} parent=1 // pred_check_branch
      %47 = sbr.rel (0) target = $region41
    $region40: #{tpu_custom_call.1} parent=1 // pred_region
      _
    $region41: #{tpu_custom_call.1} parent=1 // pred_fallthru
      _
    // Predicated region
    $region42: #{tpu_custom_call.1} parent=1 // pred_check
      _
    $region43: #{tpu_custom_call.1} parent=1 // pred_check_branch
      %49 = sbr.rel (0) target = $region45
    $region44: #{tpu_custom_call.1} parent=1 // pred_region
      _
    $region45: #{tpu_custom_call.1} parent=1 // pred_fallthru
      _
    // Predicated region
    $region46: #{tpu_custom_call.1} parent=1 // pred_check
      _
    $region47: #{tpu_custom_call.1} parent=1 // pred_check_branch
      %51 = sbr.rel (0) target = $region49
    $region48: #{tpu_custom_call.1} parent=1 // pred_region
      %53 = dma.done [#allocation4], 128
    $region49: #{tpu_custom_call.1} parent=1 // pred_fallthru
      _
    %v54 = vld [vmem:[%s0] sm:$0xff]
    %v55 = vld [vmem:[%s0 + $0x8] sm:$0xff]
    %v56 = vld [vmem:[%s0 + $0x10] sm:$0xff]
    %v57 = vld [vmem:[%s0 + $0x18] sm:$0xff]
    %v58 = vld [vmem:[%s0 + $0x20] sm:$0xff]
    %v59 = vld [vmem:[%s0 + $0x28] sm:$0xff]
    %v60 = vld [vmem:[%s0 + $0x30] sm:$0xff]
    %v61 = vld [vmem:[%s0 + $0x38] sm:$0xff]
    %v62 = vld [vmem:[#allocation3] sm:$0x3f]
    %v63 = vld [vmem:[%s2] sm:$0xff]
    %v64 = vld [vmem:[%s2 + $0x8] sm:$0xff]
    %v65 = vld [vmem:[%s2 + $0x10] sm:$0xff]
    %v66 = vld [vmem:[%s2 + $0x18] sm:$0xff]
    %v67 = vld [vmem:[%s3] sm:$0x1]
    %v68 = vld [vmem:[%s4] sm:$0x1]
    %v70 = vperm.slane %v67, 0
    %vm72 = vcmask 48128
    %v74 = vsel %vm72, %v54, 0
    %v77 = vsel %vm72, %v55, 0
    %v80 = vsel %vm72, %v56, 0
    %v83 = vsel %vm72, %v57, 0
    %v86 = vsel %vm72, %v58, 0
    %v89 = vsel %vm72, %v59, 0
    %v92 = vsel %vm72, %v60, 0
    %v95 = vsel %vm72, %v61, 0
    %vm97 = vcmask 1045504
    %v99 = vsel %vm97, %v62, 0
    %101 = vmatpush.msra.mxu0 0.0
    %102 = vmatpush.msra.mxu0 0.0
    %103 = vmatpush.msra.mxu0 0.0
    %104 = vmatpush.msra.mxu0 0.0
    %105 = vmatpush.msra.mxu0 0.0
    %106 = vmatpush.msra.mxu0 0.0
    %107 = vmatpush.msra.mxu0 0.0
    %108 = vmatpush.msra.mxu0 0.0
    %109 = vmatpush.msra.mxu0 0.0
    %110 = vmatpush.msra.mxu0 0.0
    %111 = vmatpush.msra.mxu0 0.0
    %112 = vmatpush.msra.mxu0 0.0
    %113 = vmatpush.msra.mxu0 0.0
    %114 = vmatpush.msra.mxu0 0.0
    %115 = vmatpush.msra.mxu0 0.0
    %116 = vmatpush.msra.mxu0 %v99
    %117 = vmatmul.f32.gmra.mxu0 %v74
    %v118 = vpop.f32.mrf.mxu0
    %v119 = vadd.f32 %v70, %v118
    %120 = vmatmul.f32.gmra.mxu0 %v77
    %v121 = vpop.f32.mrf.mxu0
    %v122 = vadd.f32 %v70, %v121
    %123 = vmatmul.f32.gmra.mxu0 %v80
    %v124 = vpop.f32.mrf.mxu0
    %v125 = vadd.f32 %v70, %v124
    %126 = vmatmul.f32.gmra.mxu0 %v83
    %v127 = vpop.f32.mrf.mxu0
    %v128 = vadd.f32 %v70, %v127
    %129 = vmatmul.f32.gmra.mxu0 %v86
    %v130 = vpop.f32.mrf.mxu0
    %v131 = vadd.f32 %v70, %v130
    %132 = vmatmul.f32.gmra.mxu0 %v89
    %v133 = vpop.f32.mrf.mxu0
    %v134 = vadd.f32 %v70, %v133
    %135 = vmatmul.f32.gmra.mxu0 %v92
    %v136 = vpop.f32.mrf.mxu0
    %v137 = vadd.f32 %v70, %v136
    %138 = vmatmul.f32.gmra.mxu0 %v95
    %v139 = vpop.f32.mrf.mxu0
    %v140 = vadd.f32 %v70, %v139
    %141 = vdwg.mxu0
    %v143 = vperm.slane %v68, 0
    %vm145 = vcmask 261120
    %v147 = vsel %vm145, 0.0, 0
    %149 = vmatpush.msra.mxu0 0.0
    %150 = vmatpush.msra.mxu0 0.0
    %151 = vmatpush.msra.mxu0 0.0
    %152 = vmatpush.msra.mxu0 0.0
    %153 = vmatpush.msra.mxu0 0.0
    %154 = vmatpush.msra.mxu0 0.0
    %155 = vmatpush.msra.mxu0 0.0
    %156 = vmatpush.msra.mxu0 0.0
    %157 = vmatpush.msra.mxu0 0.0
    %158 = vmatpush.msra.mxu0 0.0
    %159 = vmatpush.msra.mxu0 0.0
    %160 = vmatpush.msra.mxu0 0.0
    %161 = vmatpush.msra.mxu0 %v66
    %162 = vmatpush.msra.mxu0 %v65
    %163 = vmatpush.msra.mxu0 %v64
    %164 = vmatpush.msra.mxu0 %v63
    %165 = vmatmul.f32.gmra.mxu0 %v147
    %v166 = vpop.f32.mrf.mxu0
    %v167 = vadd.f32 %v143, %v166
    %168 = vdwg.mxu0
    %v169 = vadd.f32 %v119, %v167
    %v170 = vxor.u32 %v169, 2147483648
    %v171 = vmul.f32 %v170, 1.442695
    %v172 = vpow.pop %v171
    %v173 = vadd.f32 %v172, 1.0
    %v174 = vrcp.pop %v173
    %v175 = vmul.f32 %v173, %v174
    %v176 = vsub.f32 1.0, %v175
    %v177 = vmul.f32 %v174, %v176
    %v178 = vadd.f32 %v174, %v177
    %vm179 = vweird.f32 %v173
    %vm180 = vweird.f32 %v174
    %vm181 = vmor %vm179, %vm180
    %v182 = vsel %vm181, %v174, %v178
    %v183 = vand.u32 2147483647, %v173
    %vm184 = vcmp.eq.f32.partialorder %v183, 8.507059e+37
    %v185 = vand.u32 %v173, 2147483648
    %v186 = vor.u32 1.1754944e-38, %v185
    %v187 = vsel %vm184, %v186, %v182
    %v188 = vmul.f32 1.0, %v187
    %190 = vrot.lane.b32.xlu0 %v167, 64
    %v191 = vpop.permute.xlu0 %190
    %v193 = vmul.f32 %v188, %v191
    %195 = vrot.lane.b32.xlu0 %v193, 64
    %v196 = vpop.permute.xlu0 %195
    %v198 = vadd.f32 %v119, %v196
    %v199 = vtanh.pop %v198
    %v200 = vsub.f32 1.0, %v188
    %202 = vrot.lane.b32.xlu0 %v199, 96
    %v203 = vpop.permute.xlu0 %202
    %v205 = vmul.f32 %v200, %v203
    %v206 = vmul.f32 %v188, 0.0
    %v207 = vadd.f32 %v205, %v206
    %209 = vrot.lane.b32.xlu0 %v207, 96
    %v210 = vpop.permute.xlu0 %209
    %v211 = vsel %vm145, %v210, 0
    %213 = vmatpush.msra.mxu0 0.0
    %214 = vmatpush.msra.mxu0 0.0
    %215 = vmatpush.msra.mxu0 0.0
    %216 = vmatpush.msra.mxu0 0.0
    %217 = vmatpush.msra.mxu0 0.0
    %218 = vmatpush.msra.mxu0 0.0
    %219 = vmatpush.msra.mxu0 0.0
    %220 = vmatpush.msra.mxu0 0.0
    %221 = vmatpush.msra.mxu0 0.0
    %222 = vmatpush.msra.mxu0 0.0
    %223 = vmatpush.msra.mxu0 0.0
    %224 = vmatpush.msra.mxu0 0.0
    %225 = vmatpush.msra.mxu0 %v66
    %226 = vmatpush.msra.mxu0 %v65
    %227 = vmatpush.msra.mxu0 %v64
    %228 = vmatpush.msra.mxu0 %v63
    %229 = vmatmul.f32.gmra.mxu0 %v211
    %v230 = vpop.f32.mrf.mxu0
    %v231 = vadd.f32 %v143, %v230
    %232 = vdwg.mxu0
    %v233 = vadd.f32 %v122, %v231
    %v234 = vxor.u32 %v233, 2147483648
    %v235 = vmul.f32 %v234, 1.442695
    %v236 = vpow.pop %v235
    %v237 = vadd.f32 %v236, 1.0
    %v238 = vrcp.pop %v237
    %v239 = vmul.f32 %v237, %v238
    %v240 = vsub.f32 1.0, %v239
    %v241 = vmul.f32 %v238, %v240
    %v242 = vadd.f32 %v238, %v241
    %vm243 = vweird.f32 %v237
    %vm244 = vweird.f32 %v238
    %vm245 = vmor %vm243, %vm244
    %v246 = vsel %vm245, %v238, %v242
    %v247 = vand.u32 2147483647, %v237
    %vm248 = vcmp.eq.f32.partialorder %v247, 8.507059e+37
    %v249 = vand.u32 %v237, 2147483648
    %v250 = vor.u32 1.1754944e-38, %v249
    %v251 = vsel %vm248, %v250, %v246
    %v252 = vmul.f32 1.0, %v251
    %254 = vrot.lane.b32.xlu0 %v231, 64
    %v255 = vpop.permute.xlu0 %254
    %v257 = vmul.f32 %v252, %v255
    %259 = vrot.lane.b32.xlu0 %v257, 64
    %v260 = vpop.permute.xlu0 %259
    %v262 = vadd.f32 %v122, %v260
    %v263 = vtanh.pop %v262
    %v264 = vsub.f32 1.0, %v252
    %266 = vrot.lane.b32.xlu0 %v263, 96
    %v267 = vpop.permute.xlu0 %266
    %v269 = vmul.f32 %v264, %v267
    %v270 = vmul.f32 %v252, %v207
    %v271 = vadd.f32 %v269, %v270
    %273 = vrot.lane.b32.xlu0 %v271, 96
    %v274 = vpop.permute.xlu0 %273
    %v275 = vsel %vm145, %v274, 0
    %277 = vmatpush.msra.mxu0 0.0
    %278 = vmatpush.msra.mxu0 0.0
    %279 = vmatpush.msra.mxu0 0.0
    %280 = vmatpush.msra.mxu0 0.0
    %281 = vmatpush.msra.mxu0 0.0
    %282 = vmatpush.msra.mxu0 0.0
    %283 = vmatpush.msra.mxu0 0.0
    %284 = vmatpush.msra.mxu0 0.0
    %285 = vmatpush.msra.mxu0 0.0
    %286 = vmatpush.msra.mxu0 0.0
    %287 = vmatpush.msra.mxu0 0.0
    %288 = vmatpush.msra.mxu0 0.0
    %289 = vmatpush.msra.mxu0 %v66
    %290 = vmatpush.msra.mxu0 %v65
    %291 = vmatpush.msra.mxu0 %v64
    %292 = vmatpush.msra.mxu0 %v63
    %293 = vmatmul.f32.gmra.mxu0 %v275
    %v294 = vpop.f32.mrf.mxu0
    %v295 = vadd.f32 %v143, %v294
    %296 = vdwg.mxu0
    %v297 = vadd.f32 %v125, %v295
    %v298 = vxor.u32 %v297, 2147483648
    %v299 = vmul.f32 %v298, 1.442695
    %v300 = vpow.pop %v299
    %v301 = vadd.f32 %v300, 1.0
    %v302 = vrcp.pop %v301
    %v303 = vmul.f32 %v301, %v302
    %v304 = vsub.f32 1.0, %v303
    %v305 = vmul.f32 %v302, %v304
    %v306 = vadd.f32 %v302, %v305
    %vm307 = vweird.f32 %v301
    %vm308 = vweird.f32 %v302
    %vm309 = vmor %vm307, %vm308
    %v310 = vsel %vm309, %v302, %v306
    %v311 = vand.u32 2147483647, %v301
    %vm312 = vcmp.eq.f32.partialorder %v311, 8.507059e+37
    %v313 = vand.u32 %v301, 2147483648
    %v314 = vor.u32 1.1754944e-38, %v313
    %v315 = vsel %vm312, %v314, %v310
    %v316 = vmul.f32 1.0, %v315
    %318 = vrot.lane.b32.xlu0 %v295, 64
    %v319 = vpop.permute.xlu0 %318
    %v321 = vmul.f32 %v316, %v319
    %323 = vrot.lane.b32.xlu0 %v321, 64
    %v324 = vpop.permute.xlu0 %323
    %v326 = vadd.f32 %v125, %v324
    %v327 = vtanh.pop %v326
    %v328 = vsub.f32 1.0, %v316
    %330 = vrot.lane.b32.xlu0 %v327, 96
    %v331 = vpop.permute.xlu0 %330
    %v333 = vmul.f32 %v328, %v331
    %v334 = vmul.f32 %v316, %v271
    %v335 = vadd.f32 %v333, %v334
    %337 = vrot.lane.b32.xlu0 %v335, 96
    %v338 = vpop.permute.xlu0 %337
    %v339 = vsel %vm145, %v338, 0
    %341 = vmatpush.msra.mxu0 0.0
    %342 = vmatpush.msra.mxu0 0.0
    %343 = vmatpush.msra.mxu0 0.0
    %344 = vmatpush.msra.mxu0 0.0
    %345 = vmatpush.msra.mxu0 0.0
    %346 = vmatpush.msra.mxu0 0.0
    %347 = vmatpush.msra.mxu0 0.0
    %348 = vmatpush.msra.mxu0 0.0
    %349 = vmatpush.msra.mxu0 0.0
    %350 = vmatpush.msra.mxu0 0.0
    %351 = vmatpush.msra.mxu0 0.0
    %352 = vmatpush.msra.mxu0 0.0
    %353 = vmatpush.msra.mxu0 %v66
    %354 = vmatpush.msra.mxu0 %v65
    %355 = vmatpush.msra.mxu0 %v64
    %356 = vmatpush.msra.mxu0 %v63
    %357 = vmatmul.f32.gmra.mxu0 %v339
    %v358 = vpop.f32.mrf.mxu0
    %v359 = vadd.f32 %v143, %v358
    %360 = vdwg.mxu0
    %v361 = vadd.f32 %v128, %v359
    %v362 = vxor.u32 %v361, 2147483648
    %v363 = vmul.f32 %v362, 1.442695
    %v364 = vpow.pop %v363
    %v365 = vadd.f32 %v364, 1.0
    %v366 = vrcp.pop %v365
    %v367 = vmul.f32 %v365, %v366
    %v368 = vsub.f32 1.0, %v367
    %v369 = vmul.f32 %v366, %v368
    %v370 = vadd.f32 %v366, %v369
    %vm371 = vweird.f32 %v365
    %vm372 = vweird.f32 %v366
    %vm373 = vmor %vm371, %vm372
    %v374 = vsel %vm373, %v366, %v370
    %v375 = vand.u32 2147483647, %v365
    %vm376 = vcmp.eq.f32.partialorder %v375, 8.507059e+37
    %v377 = vand.u32 %v365, 2147483648
    %v378 = vor.u32 1.1754944e-38, %v377
    %v379 = vsel %vm376, %v378, %v374
    %v380 = vmul.f32 1.0, %v379
    %382 = vrot.lane.b32.xlu0 %v359, 64
    %v383 = vpop.permute.xlu0 %382
    %v385 = vmul.f32 %v380, %v383
    %387 = vrot.lane.b32.xlu0 %v385, 64
    %v388 = vpop.permute.xlu0 %387
    %v390 = vadd.f32 %v128, %v388
    %v391 = vtanh.pop %v390
    %v392 = vsub.f32 1.0, %v380
    %394 = vrot.lane.b32.xlu0 %v391, 96
    %v395 = vpop.permute.xlu0 %394
    %v397 = vmul.f32 %v392, %v395
    %v398 = vmul.f32 %v380, %v335
    %v399 = vadd.f32 %v397, %v398
    %401 = vrot.lane.b32.xlu0 %v399, 96
    %v402 = vpop.permute.xlu0 %401
    %v403 = vsel %vm145, %v402, 0
    %405 = vmatpush.msra.mxu0 0.0
    %406 = vmatpush.msra.mxu0 0.0
    %407 = vmatpush.msra.mxu0 0.0
    %408 = vmatpush.msra.mxu0 0.0
    %409 = vmatpush.msra.mxu0 0.0
    %410 = vmatpush.msra.mxu0 0.0
    %411 = vmatpush.msra.mxu0 0.0
    %412 = vmatpush.msra.mxu0 0.0
    %413 = vmatpush.msra.mxu0 0.0
    %414 = vmatpush.msra.mxu0 0.0
    %415 = vmatpush.msra.mxu0 0.0
    %416 = vmatpush.msra.mxu0 0.0
    %417 = vmatpush.msra.mxu0 %v66
    %418 = vmatpush.msra.mxu0 %v65
    %419 = vmatpush.msra.mxu0 %v64
    %420 = vmatpush.msra.mxu0 %v63
    %421 = vmatmul.f32.gmra.mxu0 %v403
    %v422 = vpop.f32.mrf.mxu0
    %v423 = vadd.f32 %v143, %v422
    %424 = vdwg.mxu0
    %v425 = vadd.f32 %v131, %v423
    %v426 = vxor.u32 %v425, 2147483648
    %v427 = vmul.f32 %v426, 1.442695
    %v428 = vpow.pop %v427
    %v429 = vadd.f32 %v428, 1.0
    %v430 = vrcp.pop %v429
    %v431 = vmul.f32 %v429, %v430
    %v432 = vsub.f32 1.0, %v431
    %v433 = vmul.f32 %v430, %v432
    %v434 = vadd.f32 %v430, %v433
    %vm435 = vweird.f32 %v429
    %vm436 = vweird.f32 %v430
    %vm437 = vmor %vm435, %vm436
    %v438 = vsel %vm437, %v430, %v434
    %v439 = vand.u32 2147483647, %v429
    %vm440 = vcmp.eq.f32.partialorder %v439, 8.507059e+37
    %v441 = vand.u32 %v429, 2147483648
    %v442 = vor.u32 1.1754944e-38, %v441
    %v443 = vsel %vm440, %v442, %v438
    %v444 = vmul.f32 1.0, %v443
    %446 = vrot.lane.b32.xlu0 %v423, 64
    %v447 = vpop.permute.xlu0 %446
    %v449 = vmul.f32 %v444, %v447
    %451 = vrot.lane.b32.xlu0 %v449, 64
    %v452 = vpop.permute.xlu0 %451
    %v454 = vadd.f32 %v131, %v452
    %v455 = vtanh.pop %v454
    %v456 = vsub.f32 1.0, %v444
    %458 = vrot.lane.b32.xlu0 %v455, 96
    %v459 = vpop.permute.xlu0 %458
    %v461 = vmul.f32 %v456, %v459
    %v462 = vmul.f32 %v444, %v399
    %v463 = vadd.f32 %v461, %v462
    %465 = vrot.lane.b32.xlu0 %v463, 96
    %v466 = vpop.permute.xlu0 %465
    %v467 = vsel %vm145, %v466, 0
    %469 = vmatpush.msra.mxu0 0.0
    %470 = vmatpush.msra.mxu0 0.0
    %471 = vmatpush.msra.mxu0 0.0
    %472 = vmatpush.msra.mxu0 0.0
    %473 = vmatpush.msra.mxu0 0.0
    %474 = vmatpush.msra.mxu0 0.0
    %475 = vmatpush.msra.mxu0 0.0
    %476 = vmatpush.msra.mxu0 0.0
    %477 = vmatpush.msra.mxu0 0.0
    %478 = vmatpush.msra.mxu0 0.0
    %479 = vmatpush.msra.mxu0 0.0
    %480 = vmatpush.msra.mxu0 0.0
    %481 = vmatpush.msra.mxu0 %v66
    %482 = vmatpush.msra.mxu0 %v65
    %483 = vmatpush.msra.mxu0 %v64
    %484 = vmatpush.msra.mxu0 %v63
    %485 = vmatmul.f32.gmra.mxu0 %v467
    %v486 = vpop.f32.mrf.mxu0
    %v487 = vadd.f32 %v143, %v486
    %488 = vdwg.mxu0
    %v489 = vadd.f32 %v134, %v487
    %v490 = vxor.u32 %v489, 2147483648
    %v491 = vmul.f32 %v490, 1.442695
    %v492 = vpow.pop %v491
    %v493 = vadd.f32 %v492, 1.0
    %v494 = vrcp.pop %v493
    %v495 = vmul.f32 %v493, %v494
    %v496 = vsub.f32 1.0, %v495
    %v497 = vmul.f32 %v494, %v496
    %v498 = vadd.f32 %v494, %v497
    %vm499 = vweird.f32 %v493
    %vm500 = vweird.f32 %v494
    %vm501 = vmor %vm499, %vm500
    %v502 = vsel %vm501, %v494, %v498
    %v503 = vand.u32 2147483647, %v493
    %vm504 = vcmp.eq.f32.partialorder %v503, 8.507059e+37
    %v505 = vand.u32 %v493, 2147483648
    %v506 = vor.u32 1.1754944e-38, %v505
    %v507 = vsel %vm504, %v506, %v502
    %v508 = vmul.f32 1.0, %v507
    %510 = vrot.lane.b32.xlu0 %v487, 64
    %v511 = vpop.permute.xlu0 %510
    %v513 = vmul.f32 %v508, %v511
    %515 = vrot.lane.b32.xlu0 %v513, 64
    %v516 = vpop.permute.xlu0 %515
    %v518 = vadd.f32 %v134, %v516
    %v519 = vtanh.pop %v518
    %v520 = vsub.f32 1.0, %v508
    %522 = vrot.lane.b32.xlu0 %v519, 96
    %v523 = vpop.permute.xlu0 %522
    %v525 = vmul.f32 %v520, %v523
    %v526 = vmul.f32 %v508, %v463
    %v527 = vadd.f32 %v525, %v526
    %529 = vrot.lane.b32.xlu0 %v527, 96
    %v530 = vpop.permute.xlu0 %529
    %v531 = vsel %vm145, %v530, 0
    %533 = vmatpush.msra.mxu0 0.0
    %534 = vmatpush.msra.mxu0 0.0
    %535 = vmatpush.msra.mxu0 0.0
    %536 = vmatpush.msra.mxu0 0.0
    %537 = vmatpush.msra.mxu0 0.0
    %538 = vmatpush.msra.mxu0 0.0
    %539 = vmatpush.msra.mxu0 0.0
    %540 = vmatpush.msra.mxu0 0.0
    %541 = vmatpush.msra.mxu0 0.0
    %542 = vmatpush.msra.mxu0 0.0
    %543 = vmatpush.msra.mxu0 0.0
    %544 = vmatpush.msra.mxu0 0.0
    %545 = vmatpush.msra.mxu0 %v66
    %546 = vmatpush.msra.mxu0 %v65
    %547 = vmatpush.msra.mxu0 %v64
    %548 = vmatpush.msra.mxu0 %v63
    %549 = vmatmul.f32.gmra.mxu0 %v531
    %v550 = vpop.f32.mrf.mxu0
    %v551 = vadd.f32 %v143, %v550
    %552 = vdwg.mxu0
    %v553 = vadd.f32 %v137, %v551
    %v554 = vxor.u32 %v553, 2147483648
    %v555 = vmul.f32 %v554, 1.442695
    %v556 = vpow.pop %v555
    %v557 = vadd.f32 %v556, 1.0
    %v558 = vrcp.pop %v557
    %v559 = vmul.f32 %v557, %v558
    %v560 = vsub.f32 1.0, %v559
    %v561 = vmul.f32 %v558, %v560
    %v562 = vadd.f32 %v558, %v561
    %vm563 = vweird.f32 %v557
    %vm564 = vweird.f32 %v558
    %vm565 = vmor %vm563, %vm564
    %v566 = vsel %vm565, %v558, %v562
    %v567 = vand.u32 2147483647, %v557
    %vm568 = vcmp.eq.f32.partialorder %v567, 8.507059e+37
    %v569 = vand.u32 %v557, 2147483648
    %v570 = vor.u32 1.1754944e-38, %v569
    %v571 = vsel %vm568, %v570, %v566
    %v572 = vmul.f32 1.0, %v571
    %574 = vrot.lane.b32.xlu0 %v551, 64
    %v575 = vpop.permute.xlu0 %574
    %v577 = vmul.f32 %v572, %v575
    %579 = vrot.lane.b32.xlu0 %v577, 64
    %v580 = vpop.permute.xlu0 %579
    %v582 = vadd.f32 %v137, %v580
    %v583 = vtanh.pop %v582
    %v584 = vsub.f32 1.0, %v572
    %586 = vrot.lane.b32.xlu0 %v583, 96
    %v587 = vpop.permute.xlu0 %586
    %v589 = vmul.f32 %v584, %v587
    %v590 = vmul.f32 %v572, %v527
    %v591 = vadd.f32 %v589, %v590
    %593 = vrot.lane.b32.xlu0 %v591, 96
    %v594 = vpop.permute.xlu0 %593
    %v595 = vsel %vm145, %v594, 0
    %597 = vmatpush.msra.mxu0 0.0
    %598 = vmatpush.msra.mxu0 0.0
    %599 = vmatpush.msra.mxu0 0.0
    %600 = vmatpush.msra.mxu0 0.0
    %601 = vmatpush.msra.mxu0 0.0
    %602 = vmatpush.msra.mxu0 0.0
    %603 = vmatpush.msra.mxu0 0.0
    %604 = vmatpush.msra.mxu0 0.0
    %605 = vmatpush.msra.mxu0 0.0
    %606 = vmatpush.msra.mxu0 0.0
    %607 = vmatpush.msra.mxu0 0.0
    %608 = vmatpush.msra.mxu0 0.0
    %609 = vmatpush.msra.mxu0 %v66
    %610 = vmatpush.msra.mxu0 %v65
    %611 = vmatpush.msra.mxu0 %v64
    %612 = vmatpush.msra.mxu0 %v63
    %613 = vmatmul.f32.gmra.mxu0 %v595
    %v614 = vpop.f32.mrf.mxu0
    %v615 = vadd.f32 %v143, %v614
    %616 = vdwg.mxu0
    %v617 = vadd.f32 %v140, %v615
    %v618 = vxor.u32 %v617, 2147483648
    %v619 = vmul.f32 %v618, 1.442695
    %v620 = vpow.pop %v619
    %v621 = vadd.f32 %v620, 1.0
    %v622 = vrcp.pop %v621
    %v623 = vmul.f32 %v621, %v622
    %v624 = vsub.f32 1.0, %v623
    %v625 = vmul.f32 %v622, %v624
    %v626 = vadd.f32 %v622, %v625
    %vm627 = vweird.f32 %v621
    %vm628 = vweird.f32 %v622
    %vm629 = vmor %vm627, %vm628
    %v630 = vsel %vm629, %v622, %v626
    %v631 = vand.u32 2147483647, %v621
    %vm632 = vcmp.eq.f32.partialorder %v631, 8.507059e+37
    %v633 = vand.u32 %v621, 2147483648
    %v634 = vor.u32 1.1754944e-38, %v633
    %v635 = vsel %vm632, %v634, %v630
    %v636 = vmul.f32 1.0, %v635
    %638 = vrot.lane.b32.xlu0 %v615, 64
    %v639 = vpop.permute.xlu0 %638
    %v641 = vmul.f32 %v636, %v639
    %643 = vrot.lane.b32.xlu0 %v641, 64
    %v644 = vpop.permute.xlu0 %643
    %v646 = vadd.f32 %v140, %v644
    %v647 = vtanh.pop %v646
    %v648 = vsub.f32 1.0, %v636
    %650 = vrot.lane.b32.xlu0 %v647, 96
    %v651 = vpop.permute.xlu0 %650
    %v653 = vmul.f32 %v648, %v651
    %v654 = vmul.f32 %v636, %v591
    %v655 = vadd.f32 %v653, %v654
    %v656 = vld [vmem:[%s5] sm:$0xff]
    %v657 = vld [vmem:[%s5 + $0x8] sm:$0xff]
    %v658 = vld [vmem:[%s5 + $0x10] sm:$0xff]
    %v659 = vld [vmem:[%s5 + $0x18] sm:$0xff]
    %v660 = vld [vmem:[%s6] sm:$0xff]
    %v661 = vld [vmem:[%s6 + $0x8] sm:$0xff]
    %v662 = vld [vmem:[%s6 + $0x10] sm:$0xff]
    %v663 = vld [vmem:[%s6 + $0x18] sm:$0xff]
    %v664 = vld [vmem:[%s7] sm:$0x1]
    %v665 = vld [vmem:[%s8] sm:$0x1]
    %v667 = vperm.slane %v664, 0
    %670 = vrot.lane.b32.xlu0 %v655, 96
    %v671 = vpop.permute.xlu0 %670
    %v672 = vsel %vm145, %v671, 0
    %674 = vmatpush.msra.mxu0 0.0
    %675 = vmatpush.msra.mxu0 0.0
    %676 = vmatpush.msra.mxu0 0.0
    %677 = vmatpush.msra.mxu0 0.0
    %678 = vmatpush.msra.mxu0 0.0
    %679 = vmatpush.msra.mxu0 0.0
    %680 = vmatpush.msra.mxu0 0.0
    %681 = vmatpush.msra.mxu0 0.0
    %682 = vmatpush.msra.mxu0 0.0
    %683 = vmatpush.msra.mxu0 0.0
    %684 = vmatpush.msra.mxu0 0.0
    %685 = vmatpush.msra.mxu0 0.0
    %686 = vmatpush.msra.mxu0 %v659
    %687 = vmatpush.msra.mxu0 %v658
    %688 = vmatpush.msra.mxu0 %v657
    %689 = vmatpush.msra.mxu0 %v656
    %690 = vmatmul.f32.gmra.mxu0 %v211
    %v691 = vpop.f32.mrf.mxu0
    %v692 = vadd.f32 %v667, %v691
    %693 = vmatmul.f32.gmra.mxu0 %v275
    %v694 = vpop.f32.mrf.mxu0
    %v695 = vadd.f32 %v667, %v694
    %696 = vmatmul.f32.gmra.mxu0 %v339
    %v697 = vpop.f32.mrf.mxu0
    %v698 = vadd.f32 %v667, %v697
    %699 = vmatmul.f32.gmra.mxu0 %v403
    %v700 = vpop.f32.mrf.mxu0
    %v701 = vadd.f32 %v667, %v700
    %702 = vmatmul.f32.gmra.mxu0 %v467
    %v703 = vpop.f32.mrf.mxu0
    %v704 = vadd.f32 %v667, %v703
    %705 = vmatmul.f32.gmra.mxu0 %v531
    %v706 = vpop.f32.mrf.mxu0
    %v707 = vadd.f32 %v667, %v706
    %708 = vmatmul.f32.gmra.mxu0 %v595
    %v709 = vpop.f32.mrf.mxu0
    %v710 = vadd.f32 %v667, %v709
    %711 = vmatmul.f32.gmra.mxu0 %v672
    %v712 = vpop.f32.mrf.mxu0
    %v713 = vadd.f32 %v667, %v712
    %714 = vdwg.mxu0
    %v716 = vperm.slane %v665, 0
    %718 = vmatpush.msra.mxu0 0.0
    %719 = vmatpush.msra.mxu0 0.0
    %720 = vmatpush.msra.mxu0 0.0
    %721 = vmatpush.msra.mxu0 0.0
    %722 = vmatpush.msra.mxu0 0.0
    %723 = vmatpush.msra.mxu0 0.0
    %724 = vmatpush.msra.mxu0 0.0
    %725 = vmatpush.msra.mxu0 0.0
    %726 = vmatpush.msra.mxu0 0.0
    %727 = vmatpush.msra.mxu0 0.0
    %728 = vmatpush.msra.mxu0 0.0
    %729 = vmatpush.msra.mxu0 0.0
    %730 = vmatpush.msra.mxu0 %v663
    %731 = vmatpush.msra.mxu0 %v662
    %732 = vmatpush.msra.mxu0 %v661
    %733 = vmatpush.msra.mxu0 %v660
    %734 = vmatmul.f32.gmra.mxu0 %v147
    %v735 = vpop.f32.mrf.mxu0
    %v736 = vadd.f32 %v716, %v735
    %737 = vdwg.mxu0
    %v738 = vadd.f32 %v692, %v736
    %v739 = vxor.u32 %v738, 2147483648
    %v740 = vmul.f32 %v739, 1.442695
    %v741 = vpow.pop %v740
    %v742 = vadd.f32 %v741, 1.0
    %v743 = vrcp.pop %v742
    %v744 = vmul.f32 %v742, %v743
    %v745 = vsub.f32 1.0, %v744
    %v746 = vmul.f32 %v743, %v745
    %v747 = vadd.f32 %v743, %v746
    %vm748 = vweird.f32 %v742
    %vm749 = vweird.f32 %v743
    %vm750 = vmor %vm748, %vm749
    %v751 = vsel %vm750, %v743, %v747
    %v752 = vand.u32 2147483647, %v742
    %vm753 = vcmp.eq.f32.partialorder %v752, 8.507059e+37
    %v754 = vand.u32 %v742, 2147483648
    %v755 = vor.u32 1.1754944e-38, %v754
    %v756 = vsel %vm753, %v755, %v751
    %v757 = vmul.f32 1.0, %v756
    %759 = vrot.lane.b32.xlu0 %v736, 64
    %v760 = vpop.permute.xlu0 %759
    %v762 = vmul.f32 %v757, %v760
    %764 = vrot.lane.b32.xlu0 %v762, 64
    %v765 = vpop.permute.xlu0 %764
    %v767 = vadd.f32 %v692, %v765
    %v768 = vtanh.pop %v767
    %v769 = vsub.f32 1.0, %v757
    %771 = vrot.lane.b32.xlu0 %v768, 96
    %v772 = vpop.permute.xlu0 %771
    %v774 = vmul.f32 %v769, %v772
    %v775 = vmul.f32 %v757, 0.0
    %v776 = vadd.f32 %v774, %v775
    %778 = vrot.lane.b32.xlu0 %v776, 96
    %v779 = vpop.permute.xlu0 %778
    %v780 = vsel %vm145, %v779, 0
    %782 = vmatpush.msra.mxu0 0.0
    %783 = vmatpush.msra.mxu0 0.0
    %784 = vmatpush.msra.mxu0 0.0
    %785 = vmatpush.msra.mxu0 0.0
    %786 = vmatpush.msra.mxu0 0.0
    %787 = vmatpush.msra.mxu0 0.0
    %788 = vmatpush.msra.mxu0 0.0
    %789 = vmatpush.msra.mxu0 0.0
    %790 = vmatpush.msra.mxu0 0.0
    %791 = vmatpush.msra.mxu0 0.0
    %792 = vmatpush.msra.mxu0 0.0
    %793 = vmatpush.msra.mxu0 0.0
    %794 = vmatpush.msra.mxu0 %v663
    %795 = vmatpush.msra.mxu0 %v662
    %796 = vmatpush.msra.mxu0 %v661
    %797 = vmatpush.msra.mxu0 %v660
    %798 = vmatmul.f32.gmra.mxu0 %v780
    %v799 = vpop.f32.mrf.mxu0
    %v800 = vadd.f32 %v716, %v799
    %801 = vdwg.mxu0
    %v802 = vadd.f32 %v695, %v800
    %v803 = vxor.u32 %v802, 2147483648
    %v804 = vmul.f32 %v803, 1.442695
    %v805 = vpow.pop %v804
    %v806 = vadd.f32 %v805, 1.0
    %v807 = vrcp.pop %v806
    %v808 = vmul.f32 %v806, %v807
    %v809 = vsub.f32 1.0, %v808
    %v810 = vmul.f32 %v807, %v809
    %v811 = vadd.f32 %v807, %v810
    %vm812 = vweird.f32 %v806
    %vm813 = vweird.f32 %v807
    %vm814 = vmor %vm812, %vm813
    %v815 = vsel %vm814, %v807, %v811
    %v816 = vand.u32 2147483647, %v806
    %vm817 = vcmp.eq.f32.partialorder %v816, 8.507059e+37
    %v818 = vand.u32 %v806, 2147483648
    %v819 = vor.u32 1.1754944e-38, %v818
    %v820 = vsel %vm817, %v819, %v815
    %v821 = vmul.f32 1.0, %v820
    %823 = vrot.lane.b32.xlu0 %v800, 64
    %v824 = vpop.permute.xlu0 %823
    %v826 = vmul.f32 %v821, %v824
    %828 = vrot.lane.b32.xlu0 %v826, 64
    %v829 = vpop.permute.xlu0 %828
    %v831 = vadd.f32 %v695, %v829
    %v832 = vtanh.pop %v831
    %v833 = vsub.f32 1.0, %v821
    %835 = vrot.lane.b32.xlu0 %v832, 96
    %v836 = vpop.permute.xlu0 %835
    %v838 = vmul.f32 %v833, %v836
    %v839 = vmul.f32 %v821, %v776
    %v840 = vadd.f32 %v838, %v839
    %842 = vrot.lane.b32.xlu0 %v840, 96
    %v843 = vpop.permute.xlu0 %842
    %v844 = vsel %vm145, %v843, 0
    %846 = vmatpush.msra.mxu0 0.0
    %847 = vmatpush.msra.mxu0 0.0
    %848 = vmatpush.msra.mxu0 0.0
    %849 = vmatpush.msra.mxu0 0.0
    %850 = vmatpush.msra.mxu0 0.0
    %851 = vmatpush.msra.mxu0 0.0
    %852 = vmatpush.msra.mxu0 0.0
    %853 = vmatpush.msra.mxu0 0.0
    %854 = vmatpush.msra.mxu0 0.0
    %855 = vmatpush.msra.mxu0 0.0
    %856 = vmatpush.msra.mxu0 0.0
    %857 = vmatpush.msra.mxu0 0.0
    %858 = vmatpush.msra.mxu0 %v663
    %859 = vmatpush.msra.mxu0 %v662
    %860 = vmatpush.msra.mxu0 %v661
    %861 = vmatpush.msra.mxu0 %v660
    %862 = vmatmul.f32.gmra.mxu0 %v844
    %v863 = vpop.f32.mrf.mxu0
    %v864 = vadd.f32 %v716, %v863
    %865 = vdwg.mxu0
    %v866 = vadd.f32 %v698, %v864
    %v867 = vxor.u32 %v866, 2147483648
    %v868 = vmul.f32 %v867, 1.442695
    %v869 = vpow.pop %v868
    %v870 = vadd.f32 %v869, 1.0
    %v871 = vrcp.pop %v870
    %v872 = vmul.f32 %v870, %v871
    %v873 = vsub.f32 1.0, %v872
    %v874 = vmul.f32 %v871, %v873
    %v875 = vadd.f32 %v871, %v874
    %vm876 = vweird.f32 %v870
    %vm877 = vweird.f32 %v871
    %vm878 = vmor %vm876, %vm877
    %v879 = vsel %vm878, %v871, %v875
    %v880 = vand.u32 2147483647, %v870
    %vm881 = vcmp.eq.f32.partialorder %v880, 8.507059e+37
    %v882 = vand.u32 %v870, 2147483648
    %v883 = vor.u32 1.1754944e-38, %v882
    %v884 = vsel %vm881, %v883, %v879
    %v885 = vmul.f32 1.0, %v884
    %887 = vrot.lane.b32.xlu0 %v864, 64
    %v888 = vpop.permute.xlu0 %887
    %v890 = vmul.f32 %v885, %v888
    %892 = vrot.lane.b32.xlu0 %v890, 64
    %v893 = vpop.permute.xlu0 %892
    %v895 = vadd.f32 %v698, %v893
    %v896 = vtanh.pop %v895
    %v897 = vsub.f32 1.0, %v885
    %899 = vrot.lane.b32.xlu0 %v896, 96
    %v900 = vpop.permute.xlu0 %899
    %v902 = vmul.f32 %v897, %v900
    %v903 = vmul.f32 %v885, %v840
    %v904 = vadd.f32 %v902, %v903
    %906 = vrot.lane.b32.xlu0 %v904, 96
    %v907 = vpop.permute.xlu0 %906
    %v908 = vsel %vm145, %v907, 0
    %910 = vmatpush.msra.mxu0 0.0
    %911 = vmatpush.msra.mxu0 0.0
    %912 = vmatpush.msra.mxu0 0.0
    %913 = vmatpush.msra.mxu0 0.0
    %914 = vmatpush.msra.mxu0 0.0
    %915 = vmatpush.msra.mxu0 0.0
    %916 = vmatpush.msra.mxu0 0.0
    %917 = vmatpush.msra.mxu0 0.0
    %918 = vmatpush.msra.mxu0 0.0
    %919 = vmatpush.msra.mxu0 0.0
    %920 = vmatpush.msra.mxu0 0.0
    %921 = vmatpush.msra.mxu0 0.0
    %922 = vmatpush.msra.mxu0 %v663
    %923 = vmatpush.msra.mxu0 %v662
    %924 = vmatpush.msra.mxu0 %v661
    %925 = vmatpush.msra.mxu0 %v660
    %926 = vmatmul.f32.gmra.mxu0 %v908
    %v927 = vpop.f32.mrf.mxu0
    %v928 = vadd.f32 %v716, %v927
    %929 = vdwg.mxu0
    %v930 = vadd.f32 %v701, %v928
    %v931 = vxor.u32 %v930, 2147483648
    %v932 = vmul.f32 %v931, 1.442695
    %v933 = vpow.pop %v932
    %v934 = vadd.f32 %v933, 1.0
    %v935 = vrcp.pop %v934
    %v936 = vmul.f32 %v934, %v935
    %v937 = vsub.f32 1.0, %v936
    %v938 = vmul.f32 %v935, %v937
    %v939 = vadd.f32 %v935, %v938
    %vm940 = vweird.f32 %v934
    %vm941 = vweird.f32 %v935
    %vm942 = vmor %vm940, %vm941
    %v943 = vsel %vm942, %v935, %v939
    %v944 = vand.u32 2147483647, %v934
    %vm945 = vcmp.eq.f32.partialorder %v944, 8.507059e+37
    %v946 = vand.u32 %v934, 2147483648
    %v947 = vor.u32 1.1754944e-38, %v946
    %v948 = vsel %vm945, %v947, %v943
    %v949 = vmul.f32 1.0, %v948
    %951 = vrot.lane.b32.xlu0 %v928, 64
    %v952 = vpop.permute.xlu0 %951
    %v954 = vmul.f32 %v949, %v952
    %956 = vrot.lane.b32.xlu0 %v954, 64
    %v957 = vpop.permute.xlu0 %956
    %v959 = vadd.f32 %v701, %v957
    %v960 = vtanh.pop %v959
    %v961 = vsub.f32 1.0, %v949
    %963 = vrot.lane.b32.xlu0 %v960, 96
    %v964 = vpop.permute.xlu0 %963
    %v966 = vmul.f32 %v961, %v964
    %v967 = vmul.f32 %v949, %v904
    %v968 = vadd.f32 %v966, %v967
    %970 = vrot.lane.b32.xlu0 %v968, 96
    %v971 = vpop.permute.xlu0 %970
    %v972 = vsel %vm145, %v971, 0
    %974 = vmatpush.msra.mxu0 0.0
    %975 = vmatpush.msra.mxu0 0.0
    %976 = vmatpush.msra.mxu0 0.0
    %977 = vmatpush.msra.mxu0 0.0
    %978 = vmatpush.msra.mxu0 0.0
    %979 = vmatpush.msra.mxu0 0.0
    %980 = vmatpush.msra.mxu0 0.0
    %981 = vmatpush.msra.mxu0 0.0
    %982 = vmatpush.msra.mxu0 0.0
    %983 = vmatpush.msra.mxu0 0.0
    %984 = vmatpush.msra.mxu0 0.0
    %985 = vmatpush.msra.mxu0 0.0
    %986 = vmatpush.msra.mxu0 %v663
    %987 = vmatpush.msra.mxu0 %v662
    %988 = vmatpush.msra.mxu0 %v661
    %989 = vmatpush.msra.mxu0 %v660
    %990 = vmatmul.f32.gmra.mxu0 %v972
    %v991 = vpop.f32.mrf.mxu0
    %v992 = vadd.f32 %v716, %v991
    %993 = vdwg.mxu0
    %v994 = vadd.f32 %v704, %v992
    %v995 = vxor.u32 %v994, 2147483648
    %v996 = vmul.f32 %v995, 1.442695
    %v997 = vpow.pop %v996
    %v998 = vadd.f32 %v997, 1.0
    %v999 = vrcp.pop %v998
    %v1000 = vmul.f32 %v998, %v999
    %v1001 = vsub.f32 1.0, %v1000
    %v1002 = vmul.f32 %v999, %v1001
    %v1003 = vadd.f32 %v999, %v1002
    %vm1004 = vweird.f32 %v998
    %vm1005 = vweird.f32 %v999
    %vm1006 = vmor %vm1004, %vm1005
    %v1007 = vsel %vm1006, %v999, %v1003
    %v1008 = vand.u32 2147483647, %v998
    %vm1009 = vcmp.eq.f32.partialorder %v1008, 8.507059e+37
    %v1010 = vand.u32 %v998, 2147483648
    %v1011 = vor.u32 1.1754944e-38, %v1010
    %v1012 = vsel %vm1009, %v1011, %v1007
    %v1013 = vmul.f32 1.0, %v1012
    %1015 = vrot.lane.b32.xlu0 %v992, 64
    %v1016 = vpop.permute.xlu0 %1015
    %v1018 = vmul.f32 %v1013, %v1016
    %1020 = vrot.lane.b32.xlu0 %v1018, 64
    %v1021 = vpop.permute.xlu0 %1020
    %v1023 = vadd.f32 %v704, %v1021
    %v1024 = vtanh.pop %v1023
    %v1025 = vsub.f32 1.0, %v1013
    %1027 = vrot.lane.b32.xlu0 %v1024, 96
    %v1028 = vpop.permute.xlu0 %1027
    %v1030 = vmul.f32 %v1025, %v1028
    %v1031 = vmul.f32 %v1013, %v968
    %v1032 = vadd.f32 %v1030, %v1031
    %1034 = vrot.lane.b32.xlu0 %v1032, 96
    %v1035 = vpop.permute.xlu0 %1034
    %v1036 = vsel %vm145, %v1035, 0
    %1038 = vmatpush.msra.mxu0 0.0
    %1039 = vmatpush.msra.mxu0 0.0
    %1040 = vmatpush.msra.mxu0 0.0
    %1041 = vmatpush.msra.mxu0 0.0
    %1042 = vmatpush.msra.mxu0 0.0
    %1043 = vmatpush.msra.mxu0 0.0
    %1044 = vmatpush.msra.mxu0 0.0
    %1045 = vmatpush.msra.mxu0 0.0
    %1046 = vmatpush.msra.mxu0 0.0
    %1047 = vmatpush.msra.mxu0 0.0
    %1048 = vmatpush.msra.mxu0 0.0
    %1049 = vmatpush.msra.mxu0 0.0
    %1050 = vmatpush.msra.mxu0 %v663
    %1051 = vmatpush.msra.mxu0 %v662
    %1052 = vmatpush.msra.mxu0 %v661
    %1053 = vmatpush.msra.mxu0 %v660
    %1054 = vmatmul.f32.gmra.mxu0 %v1036
    %v1055 = vpop.f32.mrf.mxu0
    %v1056 = vadd.f32 %v716, %v1055
    %1057 = vdwg.mxu0
    %v1058 = vadd.f32 %v707, %v1056
    %v1059 = vxor.u32 %v1058, 2147483648
    %v1060 = vmul.f32 %v1059, 1.442695
    %v1061 = vpow.pop %v1060
    %v1062 = vadd.f32 %v1061, 1.0
    %v1063 = vrcp.pop %v1062
    %v1064 = vmul.f32 %v1062, %v1063
    %v1065 = vsub.f32 1.0, %v1064
    %v1066 = vmul.f32 %v1063, %v1065
    %v1067 = vadd.f32 %v1063, %v1066
    %vm1068 = vweird.f32 %v1062
    %vm1069 = vweird.f32 %v1063
    %vm1070 = vmor %vm1068, %vm1069
    %v1071 = vsel %vm1070, %v1063, %v1067
    %v1072 = vand.u32 2147483647, %v1062
    %vm1073 = vcmp.eq.f32.partialorder %v1072, 8.507059e+37
    %v1074 = vand.u32 %v1062, 2147483648
    %v1075 = vor.u32 1.1754944e-38, %v1074
    %v1076 = vsel %vm1073, %v1075, %v1071
    %v1077 = vmul.f32 1.0, %v1076
    %1079 = vrot.lane.b32.xlu0 %v1056, 64
    %v1080 = vpop.permute.xlu0 %1079
    %v1082 = vmul.f32 %v1077, %v1080
    %1084 = vrot.lane.b32.xlu0 %v1082, 64
    %v1085 = vpop.permute.xlu0 %1084
    %v1087 = vadd.f32 %v707, %v1085
    %v1088 = vtanh.pop %v1087
    %v1089 = vsub.f32 1.0, %v1077
    %1091 = vrot.lane.b32.xlu0 %v1088, 96
    %v1092 = vpop.permute.xlu0 %1091
    %v1094 = vmul.f32 %v1089, %v1092
    %v1095 = vmul.f32 %v1077, %v1032
    %v1096 = vadd.f32 %v1094, %v1095
    %1098 = vrot.lane.b32.xlu0 %v1096, 96
    %v1099 = vpop.permute.xlu0 %1098
    %v1100 = vsel %vm145, %v1099, 0
    %1102 = vmatpush.msra.mxu0 0.0
    %1103 = vmatpush.msra.mxu0 0.0
    %1104 = vmatpush.msra.mxu0 0.0
    %1105 = vmatpush.msra.mxu0 0.0
    %1106 = vmatpush.msra.mxu0 0.0
    %1107 = vmatpush.msra.mxu0 0.0
    %1108 = vmatpush.msra.mxu0 0.0
    %1109 = vmatpush.msra.mxu0 0.0
    %1110 = vmatpush.msra.mxu0 0.0
    %1111 = vmatpush.msra.mxu0 0.0
    %1112 = vmatpush.msra.mxu0 0.0
    %1113 = vmatpush.msra.mxu0 0.0
    %1114 = vmatpush.msra.mxu0 %v663
    %1115 = vmatpush.msra.mxu0 %v662
    %1116 = vmatpush.msra.mxu0 %v661
    %1117 = vmatpush.msra.mxu0 %v660
    %1118 = vmatmul.f32.gmra.mxu0 %v1100
    %v1119 = vpop.f32.mrf.mxu0
    %v1120 = vadd.f32 %v716, %v1119
    %1121 = vdwg.mxu0
    %v1122 = vadd.f32 %v710, %v1120
    %v1123 = vxor.u32 %v1122, 2147483648
    %v1124 = vmul.f32 %v1123, 1.442695
    %v1125 = vpow.pop %v1124
    %v1126 = vadd.f32 %v1125, 1.0
    %v1127 = vrcp.pop %v1126
    %v1128 = vmul.f32 %v1126, %v1127
    %v1129 = vsub.f32 1.0, %v1128
    %v1130 = vmul.f32 %v1127, %v1129
    %v1131 = vadd.f32 %v1127, %v1130
    %vm1132 = vweird.f32 %v1126
    %vm1133 = vweird.f32 %v1127
    %vm1134 = vmor %vm1132, %vm1133
    %v1135 = vsel %vm1134, %v1127, %v1131
    %v1136 = vand.u32 2147483647, %v1126
    %vm1137 = vcmp.eq.f32.partialorder %v1136, 8.507059e+37
    %v1138 = vand.u32 %v1126, 2147483648
    %v1139 = vor.u32 1.1754944e-38, %v1138
    %v1140 = vsel %vm1137, %v1139, %v1135
    %v1141 = vmul.f32 1.0, %v1140
    %1143 = vrot.lane.b32.xlu0 %v1120, 64
    %v1144 = vpop.permute.xlu0 %1143
    %v1146 = vmul.f32 %v1141, %v1144
    %1148 = vrot.lane.b32.xlu0 %v1146, 64
    %v1149 = vpop.permute.xlu0 %1148
    %v1151 = vadd.f32 %v710, %v1149
    %v1152 = vtanh.pop %v1151
    %v1153 = vsub.f32 1.0, %v1141
    %1155 = vrot.lane.b32.xlu0 %v1152, 96
    %v1156 = vpop.permute.xlu0 %1155
    %v1158 = vmul.f32 %v1153, %v1156
    %v1159 = vmul.f32 %v1141, %v1096
    %v1160 = vadd.f32 %v1158, %v1159
    %1162 = vrot.lane.b32.xlu0 %v1160, 96
    %v1163 = vpop.permute.xlu0 %1162
    %v1164 = vsel %vm145, %v1163, 0
    %1166 = vmatpush.msra.mxu0 0.0
    %1167 = vmatpush.msra.mxu0 0.0
    %1168 = vmatpush.msra.mxu0 0.0
    %1169 = vmatpush.msra.mxu0 0.0
    %1170 = vmatpush.msra.mxu0 0.0
    %1171 = vmatpush.msra.mxu0 0.0
    %1172 = vmatpush.msra.mxu0 0.0
    %1173 = vmatpush.msra.mxu0 0.0
    %1174 = vmatpush.msra.mxu0 0.0
    %1175 = vmatpush.msra.mxu0 0.0
    %1176 = vmatpush.msra.mxu0 0.0
    %1177 = vmatpush.msra.mxu0 0.0
    %1178 = vmatpush.msra.mxu0 %v663
    %1179 = vmatpush.msra.mxu0 %v662
    %1180 = vmatpush.msra.mxu0 %v661
    %1181 = vmatpush.msra.mxu0 %v660
    %1182 = vmatmul.f32.gmra.mxu0 %v1164
    %v1183 = vpop.f32.mrf.mxu0
    %v1184 = vadd.f32 %v716, %v1183
    %1185 = vdwg.mxu0
    %v1186 = vadd.f32 %v713, %v1184
    %v1187 = vxor.u32 %v1186, 2147483648
    %v1188 = vmul.f32 %v1187, 1.442695
    %v1189 = vpow.pop %v1188
    %v1190 = vadd.f32 %v1189, 1.0
    %v1191 = vrcp.pop %v1190
    %v1192 = vmul.f32 %v1190, %v1191
    %v1193 = vsub.f32 1.0, %v1192
    %v1194 = vmul.f32 %v1191, %v1193
    %v1195 = vadd.f32 %v1191, %v1194
    %vm1196 = vweird.f32 %v1190
    %vm1197 = vweird.f32 %v1191
    %vm1198 = vmor %vm1196, %vm1197
    %v1199 = vsel %vm1198, %v1191, %v1195
    %v1200 = vand.u32 2147483647, %v1190
    %vm1201 = vcmp.eq.f32.partialorder %v1200, 8.507059e+37
    %v1202 = vand.u32 %v1190, 2147483648
    %v1203 = vor.u32 1.1754944e-38, %v1202
    %v1204 = vsel %vm1201, %v1203, %v1199
    %v1205 = vmul.f32 1.0, %v1204
    %1207 = vrot.lane.b32.xlu0 %v1184, 64
    %v1208 = vpop.permute.xlu0 %1207
    %v1210 = vmul.f32 %v1205, %v1208
    %1212 = vrot.lane.b32.xlu0 %v1210, 64
    %v1213 = vpop.permute.xlu0 %1212
    %v1215 = vadd.f32 %v713, %v1213
    %v1216 = vtanh.pop %v1215
    %v1217 = vsub.f32 1.0, %v1205
    %1219 = vrot.lane.b32.xlu0 %v1216, 96
    %v1220 = vpop.permute.xlu0 %1219
    %v1222 = vmul.f32 %v1217, %v1220
    %v1223 = vmul.f32 %v1205, %v1160
    %v1224 = vadd.f32 %v1222, %v1223
    %v1225 = vld [vmem:[%s9] sm:$0xff]
    %v1226 = vld [vmem:[%s9 + $0x8] sm:$0xff]
    %v1227 = vld [vmem:[%s9 + $0x10] sm:$0xff]
    %v1228 = vld [vmem:[%s9 + $0x18] sm:$0xff]
    %v1229 = vld [vmem:[#allocation2] sm:$0x1]
    %v1231 = vperm.slane %v1229, 0
    %1234 = vrot.lane.b32.xlu0 %v1224, 96
    %v1235 = vpop.permute.xlu0 %1234
    %v1236 = vsel %vm145, %v1235, 0
    %1238 = vmatpush.msra.mxu0 0.0
    %1239 = vmatpush.msra.mxu0 0.0
    %1240 = vmatpush.msra.mxu0 0.0
    %1241 = vmatpush.msra.mxu0 0.0
    %1242 = vmatpush.msra.mxu0 0.0
    %1243 = vmatpush.msra.mxu0 0.0
    %1244 = vmatpush.msra.mxu0 0.0
    %1245 = vmatpush.msra.mxu0 0.0
    %1246 = vmatpush.msra.mxu0 0.0
    %1247 = vmatpush.msra.mxu0 0.0
    %1248 = vmatpush.msra.mxu0 0.0
    %1249 = vmatpush.msra.mxu0 0.0
    %1250 = vmatpush.msra.mxu0 %v1228
    %1251 = vmatpush.msra.mxu0 %v1227
    %1252 = vmatpush.msra.mxu0 %v1226
    %1253 = vmatpush.msra.mxu0 %v1225
    %1254 = vmatmul.f32.gmra.mxu0 %v1236
    %v1255 = vpop.f32.mrf.mxu0
    %v1256 = vadd.f32 %v1231, %v1255
    %1257 = vdwg.mxu0
    %vm1258 = vcmask 7168
    %1259 = vst.msk [vmem:[%s11] sm:$0xff] %vm1258, %v1256
    // Predicated region
    $region50: #{tpu_custom_call.1} parent=1 // pred_check
      _
    $region51: #{tpu_custom_call.1} parent=1 // pred_check_branch
      %1261 = sbr.rel (0) target = $region53
    $region52: #{tpu_custom_call.1} parent=1 // pred_region
      _
    $region53: #{tpu_custom_call.1} parent=1 // pred_fallthru
      _
    // Predicated region
    $region54: #{tpu_custom_call.1} parent=1 // pred_check
      _
    $region55: #{tpu_custom_call.1} parent=1 // pred_check_branch
      %1263 = sbr.rel (0) target = $region57
    $region56: #{tpu_custom_call.1} parent=1 // pred_region
      _
    $region57: #{tpu_custom_call.1} parent=1 // pred_fallthru
      _
    %1264 = vsyncpa [#allocation4], 1

</llo_original>
